<compile_context>
chip_gen: v6e
topology: v6e:2x2x1
jax: 0.10.0
libtpu: 0.0.40
codegen_flags: <defaults>
</compile_context>

<pallas_src>
import jax
import jax.numpy as jnp
from jax.experimental import pallas as pl
from jax.experimental.pallas import tpu as pltpu


def _predictor_kernel(x_ref, w1_ref, b1_ref, w2_ref, b2_ref, w3_ref, b3_ref, o_ref):
    """Fused 3-layer MLP, batch on the sublane axis.

    x_ref  : (bt, 147) f32
    w1_ref : (147, 128) f32   b1_ref : (1, 128) f32
    w2_ref : (128, 64)  f32   b2_ref : (1, 64)  f32
    w3_ref : (1, 64)    f32   b3_ref : (1, 1)   f32
    o_ref  : (bt, 1)    f32
    """
    x = x_ref[...]

    # Layer 1 (MXU): (bt,147) @ (147,128) -> (bt,128), f32 accumulation.
    h1 = jnp.dot(x, w1_ref[...], preferred_element_type=jnp.float32)
    h1 = jnp.maximum(h1 + b1_ref[...], 0.0)

    # Layer 2 (MXU): (bt,128) @ (128,64) -> (bt,64).
    h2 = jnp.dot(h1, w2_ref[...], preferred_element_type=jnp.float32)
    h2 = jnp.maximum(h2 + b2_ref[...], 0.0)

    # Layer 3 (N=1) off the MXU: VPU broadcast-multiply + XLU lane reduction.
    out = jnp.sum(h2 * w3_ref[...], axis=-1, keepdims=True) + b3_ref[...]
    o_ref[...] = out.astype(o_ref.dtype)


def _round_up(n, m):
    return ((n + m - 1) // m) * m


def _choose_batch_tile(B, batch_tile):
    """Cap the tile so the grid has >= 2 steps when B allows (v7x: 2 TCs per
    chip share 'parallel' grid steps), and keep it sublane-aligned (mult of 8)."""
    half = _round_up(max(pl.cdiv(B, 2), 1), 8)
    return max(8, min(batch_tile, half))


def predictor_forward(x, kernel_params, *, batch_tile=2048):
    """x: [B, 147] float32 -> [B, 1] float32.  No wrapper-side copies of x."""
    w1t, b1, w2t, b2, w3r, b3 = kernel_params
    B, F = x.shape
    assert F == w1t.shape[0], "feature dim mismatch"

    bt = _choose_batch_tile(B, batch_tile)
    grid = (pl.cdiv(B, bt),)

    # x streams from HBM in (bt, 147) tiles; 147 == full dim so no lane pad of
    # the array itself is needed.
    x_spec = pl.BlockSpec((bt, F), lambda i: (i, 0))
    # Weights/biases: whole-array blocks pinned to (0, 0) -> VMEM-resident,
    # re-DMA skipped on revisit across grid steps.
    w1_spec = pl.BlockSpec(w1t.shape, lambda i: (0, 0))
    b1_spec = pl.BlockSpec(b1.shape, lambda i: (0, 0))
    w2_spec = pl.BlockSpec(w2t.shape, lambda i: (0, 0))
    b2_spec = pl.BlockSpec(b2.shape, lambda i: (0, 0))
    w3_spec = pl.BlockSpec(w3r.shape, lambda i: (0, 0))
    b3_spec = pl.BlockSpec(b3.shape, lambda i: (0, 0))
    out_spec = pl.BlockSpec((bt, 1), lambda i: (i, 0))

    return pl.pallas_call(
        _predictor_kernel,
        out_shape=jax.ShapeDtypeStruct((B, 1), jnp.float32),
        grid_spec=pltpu.PrefetchScalarGridSpec(
            num_scalar_prefetch=0,
            grid=grid,
            in_specs=[x_spec, w1_spec, b1_spec, w2_spec, b2_spec, w3_spec, b3_spec],
            out_specs=out_spec,
        ),
        compiler_params=pltpu.CompilerParams(
            dimension_semantics=("parallel",),
        ),
    )(x, w1t, b1, w2t, b2, w3r, b3)


def init_params(key):
    """Deterministic synthetic parameters in PyTorch nn.Linear layout:
    weight (out, in), bias (out,)."""
    k1, k2, k3, k4, k5, k6 = jax.random.split(key, 6)

    def lin(kw, kb, fan_in, fan_out):
        bound = 1.0 / jnp.sqrt(fan_in)
        w = jax.random.uniform(kw, (fan_out, fan_in), jnp.float32, -bound, bound)
        b = jax.random.uniform(kb, (fan_out,), jnp.float32, -bound, bound)
        return w, b

    w1, b1 = lin(k1, k2, 147, 128)
    w2, b2 = lin(k3, k4, 128, 64)
    w3, b3 = lin(k5, k6, 64, 1)
    return (w1, b1, w2, b2, w3, b3)


def prepare_params(torch_params):
    """PyTorch nn.Linear layout -> kernel layout (tiny one-time transposes,
    all f32; the kernel is HBM-bound on x so bf16 weights buy nothing)."""
    w1, b1, w2, b2, w3, b3 = torch_params
    w1t = jnp.asarray(w1, jnp.float32).T                 # (147, 128)
    b1k = jnp.asarray(b1, jnp.float32).reshape(1, -1)    # (1, 128)
    w2t = jnp.asarray(w2, jnp.float32).T                 # (128, 64)
    b2k = jnp.asarray(b2, jnp.float32).reshape(1, -1)    # (1, 64)
    w3r = jnp.asarray(w3, jnp.float32).reshape(1, -1)    # (1, 64)
    b3k = jnp.asarray(b3, jnp.float32).reshape(1, 1)     # (1, 1)
    return (w1t, b1k, w2t, b2k, w3r, b3k)


def predictor_ref(x, torch_params):
    w1, b1, w2, b2, w3, b3 = torch_params
    h1 = jnp.maximum(x @ w1.T + b1, 0.0)
    h2 = jnp.maximum(h1 @ w2.T + b2, 0.0)
    return h2 @ w3.T + b3


if __name__ == "__main__":
    key = jax.random.PRNGKey(0)
    k_params, k_x = jax.random.split(key)

    torch_params = init_params(k_params)          # PyTorch layout, f32
    kernel_params = prepare_params(torch_params)  # kernel layout, once

    # Small batch that is not a multiple of 8 or of the tile: exercises the
    # >=2-grid-step heuristic (tile shrinks to 504 -> 2 steps) and Pallas'
    # partial-block input padding / masked output stores.
    B = 1000
    x = jax.random.normal(k_x, (B, 147), dtype=jnp.float32)

    out = predictor_forward(x, kernel_params)
    out = jax.block_until_ready(out)

    ref = predictor_ref(x, torch_params)
    assert out.shape == (B, 1)
    max_err = float(jnp.max(jnp.abs(out - ref)))
    # Default TPU matmul precision may run f32 contractions via bf16 passes.
    assert max_err < 2e-2, f"mismatch vs reference: max_err={max_err}"

    print("KERNEL_OK")
</pallas_src>

<mosaic_0001>
module attributes {stable_mosaic.version = 11 : i64} {
  func.func @_predictor_kernel(%arg0: i32, %arg1: memref<504x147xf32, #tpu.memory_space<vmem>>, %arg2: memref<147x128xf32, #tpu.memory_space<vmem>>, %arg3: memref<1x128xf32, #tpu.memory_space<vmem>>, %arg4: memref<128x64xf32, #tpu.memory_space<vmem>>, %arg5: memref<1x64xf32, #tpu.memory_space<vmem>>, %arg6: memref<1x64xf32, #tpu.memory_space<vmem>>, %arg7: memref<1x1xf32, #tpu.memory_space<vmem>>, %arg8: memref<504x1xf32, #tpu.memory_space<vmem>>) attributes {dimension_semantics = [#tpu.dimension_semantics<parallel>], iteration_bounds = array<i64: 2>, scalar_prefetch = 0 : i64, scratch_operands = 0 : i64, tpu.core_type = #tpu.core_type<tc>, window_params = [{transform_indices = @transform_0, window_bounds = array<i64: 504, 147>}, {pipeline_mode = #tpu.pipeline_mode<synchronous>, transform_indices = @transform_1, window_bounds = array<i64: 147, 128>}, {pipeline_mode = #tpu.pipeline_mode<synchronous>, transform_indices = @transform_2, window_bounds = array<i64: 1, 128>}, {pipeline_mode = #tpu.pipeline_mode<synchronous>, transform_indices = @transform_3, window_bounds = array<i64: 128, 64>}, {pipeline_mode = #tpu.pipeline_mode<synchronous>, transform_indices = @transform_4, window_bounds = array<i64: 1, 64>}, {pipeline_mode = #tpu.pipeline_mode<synchronous>, transform_indices = @transform_5, window_bounds = array<i64: 1, 64>}, {pipeline_mode = #tpu.pipeline_mode<synchronous>, transform_indices = @transform_6, window_bounds = array<i64: 1, 1>}, {transform_indices = @transform_7, window_bounds = array<i64: 504, 1>}]} {
    %c0 = arith.constant 0 : index
    %c0_0 = arith.constant 0 : index
    %0 = vector.load %arg1[%c0, %c0_0] : memref<504x147xf32, #tpu.memory_space<vmem>>, vector<504x147xf32>
    %c0_1 = arith.constant 0 : index
    %c0_2 = arith.constant 0 : index
    %1 = vector.load %arg2[%c0_1, %c0_2] : memref<147x128xf32, #tpu.memory_space<vmem>>, vector<147x128xf32>
    %cst = arith.constant dense<0.000000e+00> : vector<504x128xf32>
    %2 = tpu.matmul %0, %1, %cst {dimension_numbers = #tpu.dot_dimension_numbers<[1], [0], [0], [1], [0, 0, 1, 1], [], []>} : vector<504x147xf32>, vector<147x128xf32>, vector<504x128xf32> -> vector<504x128xf32>
    %c0_3 = arith.constant 0 : index
    %c0_4 = arith.constant 0 : index
    %3 = vector.load %arg3[%c0_3, %c0_4] : memref<1x128xf32, #tpu.memory_space<vmem>>, vector<1x128xf32>
    %4 = vector.broadcast %3 : vector<1x128xf32> to vector<504x128xf32>
    %5 = arith.addf %2, %4 : vector<504x128xf32>
    %cst_5 = arith.constant 0.000000e+00 : f32
    %6 = vector.broadcast %cst_5 : f32 to vector<504x128xf32>
    %7 = arith.maximumf %5, %6 : vector<504x128xf32>
    %c0_6 = arith.constant 0 : index
    %c0_7 = arith.constant 0 : index
    %8 = vector.load %arg4[%c0_6, %c0_7] : memref<128x64xf32, #tpu.memory_space<vmem>>, vector<128x64xf32>
    %cst_8 = arith.constant dense<0.000000e+00> : vector<504x64xf32>
    %9 = tpu.matmul %7, %8, %cst_8 {dimension_numbers = #tpu.dot_dimension_numbers<[1], [0], [0], [1], [0, 0, 1, 1], [], []>} : vector<504x128xf32>, vector<128x64xf32>, vector<504x64xf32> -> vector<504x64xf32>
    %c0_9 = arith.constant 0 : index
    %c0_10 = arith.constant 0 : index
    %10 = vector.load %arg5[%c0_9, %c0_10] : memref<1x64xf32, #tpu.memory_space<vmem>>, vector<1x64xf32>
    %11 = vector.broadcast %10 : vector<1x64xf32> to vector<504x64xf32>
    %12 = arith.addf %9, %11 : vector<504x64xf32>
    %cst_11 = arith.constant 0.000000e+00 : f32
    %13 = vector.broadcast %cst_11 : f32 to vector<504x64xf32>
    %14 = arith.maximumf %12, %13 : vector<504x64xf32>
    %c0_12 = arith.constant 0 : index
    %c0_13 = arith.constant 0 : index
    %15 = vector.load %arg6[%c0_12, %c0_13] : memref<1x64xf32, #tpu.memory_space<vmem>>, vector<1x64xf32>
    %16 = vector.broadcast %15 : vector<1x64xf32> to vector<504x64xf32>
    %17 = arith.mulf %14, %16 : vector<504x64xf32>
    %cst_14 = arith.constant dense<0.000000e+00> : vector<504xf32>
    %18 = vector.multi_reduction <add>, %17, %cst_14 [1] : vector<504x64xf32> to vector<504xf32>
    %19 = vector.shape_cast %18 : vector<504xf32> to vector<504x1xf32>
    %c0_15 = arith.constant 0 : index
    %c0_16 = arith.constant 0 : index
    %20 = vector.load %arg7[%c0_15, %c0_16] : memref<1x1xf32, #tpu.memory_space<vmem>>, vector<1x1xf32>
    %21 = vector.broadcast %20 : vector<1x1xf32> to vector<504x1xf32>
    %22 = arith.addf %19, %21 : vector<504x1xf32>
    %c0_17 = arith.constant 0 : index
    %c0_18 = arith.constant 0 : index
    %23 = vector.load %arg8[%c0_17, %c0_18] : memref<504x1xf32, #tpu.memory_space<vmem>>, vector<504x1xf32>
    tpu.vector_store %arg8[%c0_17, %c0_18], %22 {strides = array<i32>} : memref<504x1xf32, #tpu.memory_space<vmem>>, vector<504x1xf32>,
    return
  }
  func.func @transform_0(%arg0: i32) -> (i32, i32) {
    %c0_i32 = arith.constant 0 : i32
    %c0_i32_0 = arith.constant 0 : i32
    return %arg0, %c0_i32 : i32, i32
  }
  func.func @transform_1(%arg0: i32) -> (i32, i32) {
    %c0_i32 = arith.constant 0 : i32
    %c0_i32_0 = arith.constant 0 : i32
    %c0_i32_1 = arith.constant 0 : i32
    return %c0_i32, %c0_i32_0 : i32, i32
  }
  func.func @transform_2(%arg0: i32) -> (i32, i32) {
    %c0_i32 = arith.constant 0 : i32
    %c0_i32_0 = arith.constant 0 : i32
    %c0_i32_1 = arith.constant 0 : i32
    return %c0_i32, %c0_i32_0 : i32, i32
  }
  func.func @transform_3(%arg0: i32) -> (i32, i32) {
    %c0_i32 = arith.constant 0 : i32
    %c0_i32_0 = arith.constant 0 : i32
    %c0_i32_1 = arith.constant 0 : i32
    return %c0_i32, %c0_i32_0 : i32, i32
  }
  func.func @transform_4(%arg0: i32) -> (i32, i32) {
    %c0_i32 = arith.constant 0 : i32
    %c0_i32_0 = arith.constant 0 : i32
    %c0_i32_1 = arith.constant 0 : i32
    return %c0_i32, %c0_i32_0 : i32, i32
  }
  func.func @transform_5(%arg0: i32) -> (i32, i32) {
    %c0_i32 = arith.constant 0 : i32
    %c0_i32_0 = arith.constant 0 : i32
    %c0_i32_1 = arith.constant 0 : i32
    return %c0_i32, %c0_i32_0 : i32, i32
  }
  func.func @transform_6(%arg0: i32) -> (i32, i32) {
    %c0_i32 = arith.constant 0 : i32
    %c0_i32_0 = arith.constant 0 : i32
    %c0_i32_1 = arith.constant 0 : i32
    return %c0_i32, %c0_i32_0 : i32, i32
  }
  func.func @transform_7(%arg0: i32) -> (i32, i32) {
    %c0_i32 = arith.constant 0 : i32
    %c0_i32_0 = arith.constant 0 : i32
    return %arg0, %c0_i32 : i32, i32
  }
}

</mosaic_0001>

<llo_original>
// kernel: tpu_custom_call.1
$region0: #{tpu_custom_call.1}
  #allocation0 [shape = 'u32[]', space=smem, size = 0x4, offset = 0x4, fixed_abs, tag = 'smem constant byte address 0x4 - core index']
  #allocation1 [shape = 'u32[144,128]{1,0:T(1,128)}', space=vmem, size = 0x12000, scoped, tag = 'internal scratch']
  #allocation2 [shape = 'f32[1,1]{1,0:T(1,128)S(1)}', space=vmem, size = 0x200, scoped, tag = 'scoped memory for tpu_custom_call.1']
  %s0 = inlined_call_operand.vmem [shape: f32[1000,147], index: 0, kind: input, shape index: {}]
  %s1 = inlined_call_operand.vmem [shape: f32[147,128], index: 1, kind: input, shape index: {}]
  %s2 = inlined_call_operand.vmem [shape: f32[1,128], index: 2, kind: input, shape index: {}]
  %s3 = inlined_call_operand.vmem [shape: f32[128,64], index: 3, kind: input, shape index: {}]
  %s4 = inlined_call_operand.vmem [shape: f32[1,64], index: 4, kind: input, shape index: {}]
  %s5 = inlined_call_operand.vmem [shape: f32[1,64], index: 5, kind: input, shape index: {}]
  %s6 = inlined_call_operand.<no memory space> [shape: f32[1,1], index: 6, kind: input, shape index: {}]
  %s7 = inlined_call_operand.vmem [shape: f32[1000,1], index: 7, kind: output, shape index: {}]
  %s8 = sld [smem:[#allocation0]]
  $region109: #{tpu_custom_call.1} parent=0
    _
  %s10 = ssub.s32 1, %s8
  %s11 = scalar_select 0, %s10, %s8
  %v12 = vstv %s6
  %13 = vst [vmem:[#allocation2] sm:$0x1] %v12
  $region1: #{tpu_custom_call.1} parent=0
    #allocation3 [shape = 'u8[516096]{0}', space=vmem, size = 0x7e000, scoped, tag = 'output window, operand 0']
    loop: start=0, step=1, limit=4
    $region2: #{tpu_custom_call.1} parent=1 // loop_pre_header
      _
    $region3: #{tpu_custom_call.1} parent=1 // loop_header
      %s15 = sphi 0, %s19
      %p16 = scmp.ge.s32.totalorder %s15, 4
      %s25 = sphi 0, %s27
      %s28 = sphi 0, %s25
      %s29 = sphi 0, %s28
      %s45 = sphi 0, %s29
      %s49 = sphi 0, %s49
      %s51 = sphi 0, %s49
      %s52 = sphi 0, %s51
      %s66 = sphi 0, %s52
      %s70 = sphi 0, %s70
      %s72 = sphi 0, %s70
      %s73 = sphi 0, %s72
      %s87 = sphi 0, %s73
      %s91 = sphi 0, %s91
      %s93 = sphi 0, %s91
      %s94 = sphi 0, %s93
      %s108 = sphi 0, %s94
      %s112 = sphi 0, %s112
      %s114 = sphi 0, %s112
      %s115 = sphi 0, %s114
      %s129 = sphi 0, %s115
      %s133 = sphi 0, %s133
      %s135 = sphi 0, %s133
      %s136 = sphi 0, %s135
      %s150 = sphi 0, %s136
      %s154 = sphi 0, %s154
      %s156 = sphi 0, %s154
      %s157 = sphi 0, %s156
      %s171 = sphi 0, %s157
      %s177 = sphi 0, %s179
      %s180 = sphi 0, %s177
      %s181 = sphi 0, %s180
      %s197 = sphi 0, %s181
    $region4: #{tpu_custom_call.1} parent=1 // loop_header_branch
      %18 = sbr.rel (%p16) target = $region8
    $region5: #{tpu_custom_call.1} parent=1 // loop_body
      %s20 = ssub.s32 %s15, 1
      %s21 = ssub.s32 %s15, 2
      %s22 = sadd.s32 %s15, 1
      %s23 = ssub.s32 %s15, %s22
      %p24 = scmp.eq.s32.totalorder %s23, 0
      %s26 = sadd.s32 %s25, 1
      %s27 = scalar_select %p24, %s25, %s26
      %p30 = pneg %p24
      %p31 = scmp.eq.s32.totalorder %s15, 1
      %p32 = por %p30, %p31
      %p33 = scmp.ne.s32.totalorder %s25, %s28
      %p34 = scmp.eq.s32.totalorder %s15, 0
      %p35 = por %p33, %p34
      %p36 = scmp.ne.s32.totalorder %s25, %s28
      %p37 = scmp.eq.s32.totalorder %s20, 1
      %p38 = por %p36, %p37
      %p39 = scmp.ne.s32.totalorder %s28, %s29
      %p40 = scmp.eq.s32.totalorder %s20, 0
      %p41 = por %p39, %p40
      %p42 = scmp.ne.s32.totalorder %s28, %s29
      %p43 = scmp.eq.s32.totalorder %s21, 1
      %p44 = por %p42, %p43
      %p46 = scmp.ne.s32.totalorder %s29, %s45
      %p47 = scmp.eq.s32.totalorder %s21, 0
      %p48 = por %p46, %p47
      %s50 = sadd.s32 %s49, 1
      %p53 = scmp.eq.s32.totalorder %s15, 1
      %p54 = scmp.ne.s32.totalorder %s49, %s51
      %p55 = scmp.eq.s32.totalorder %s15, 0
      %p56 = por %p54, %p55
      %p57 = scmp.ne.s32.totalorder %s49, %s51
      %p58 = scmp.eq.s32.totalorder %s20, 1
      %p59 = por %p57, %p58
      %p60 = scmp.ne.s32.totalorder %s51, %s52
      %p61 = scmp.eq.s32.totalorder %s20, 0
      %p62 = por %p60, %p61
      %p63 = scmp.ne.s32.totalorder %s51, %s52
      %p64 = scmp.eq.s32.totalorder %s21, 1
      %p65 = por %p63, %p64
      %p67 = scmp.ne.s32.totalorder %s52, %s66
      %p68 = scmp.eq.s32.totalorder %s21, 0
      %p69 = por %p67, %p68
      %s71 = sadd.s32 %s70, 1
      %p74 = scmp.eq.s32.totalorder %s15, 1
      %p75 = scmp.ne.s32.totalorder %s70, %s72
      %p76 = scmp.eq.s32.totalorder %s15, 0
      %p77 = por %p75, %p76
      %p78 = scmp.ne.s32.totalorder %s70, %s72
      %p79 = scmp.eq.s32.totalorder %s20, 1
      %p80 = por %p78, %p79
      %p81 = scmp.ne.s32.totalorder %s72, %s73
      %p82 = scmp.eq.s32.totalorder %s20, 0
      %p83 = por %p81, %p82
      %p84 = scmp.ne.s32.totalorder %s72, %s73
      %p85 = scmp.eq.s32.totalorder %s21, 1
      %p86 = por %p84, %p85
      %p88 = scmp.ne.s32.totalorder %s73, %s87
      %p89 = scmp.eq.s32.totalorder %s21, 0
      %p90 = por %p88, %p89
      %s92 = sadd.s32 %s91, 1
      %p95 = scmp.eq.s32.totalorder %s15, 1
      %p96 = scmp.ne.s32.totalorder %s91, %s93
      %p97 = scmp.eq.s32.totalorder %s15, 0
      %p98 = por %p96, %p97
      %p99 = scmp.ne.s32.totalorder %s91, %s93
      %p100 = scmp.eq.s32.totalorder %s20, 1
      %p101 = por %p99, %p100
      %p102 = scmp.ne.s32.totalorder %s93, %s94
      %p103 = scmp.eq.s32.totalorder %s20, 0
      %p104 = por %p102, %p103
      %p105 = scmp.ne.s32.totalorder %s93, %s94
      %p106 = scmp.eq.s32.totalorder %s21, 1
      %p107 = por %p105, %p106
      %p109 = scmp.ne.s32.totalorder %s94, %s108
      %p110 = scmp.eq.s32.totalorder %s21, 0
      %p111 = por %p109, %p110
      %s113 = sadd.s32 %s112, 1
      %p116 = scmp.eq.s32.totalorder %s15, 1
      %p117 = scmp.ne.s32.totalorder %s112, %s114
      %p118 = scmp.eq.s32.totalorder %s15, 0
      %p119 = por %p117, %p118
      %p120 = scmp.ne.s32.totalorder %s112, %s114
      %p121 = scmp.eq.s32.totalorder %s20, 1
      %p122 = por %p120, %p121
      %p123 = scmp.ne.s32.totalorder %s114, %s115
      %p124 = scmp.eq.s32.totalorder %s20, 0
      %p125 = por %p123, %p124
      %p126 = scmp.ne.s32.totalorder %s114, %s115
      %p127 = scmp.eq.s32.totalorder %s21, 1
      %p128 = por %p126, %p127
      %p130 = scmp.ne.s32.totalorder %s115, %s129
      %p131 = scmp.eq.s32.totalorder %s21, 0
      %p132 = por %p130, %p131
      %s134 = sadd.s32 %s133, 1
      %p137 = scmp.eq.s32.totalorder %s15, 1
      %p138 = scmp.ne.s32.totalorder %s133, %s135
      %p139 = scmp.eq.s32.totalorder %s15, 0
      %p140 = por %p138, %p139
      %p141 = scmp.ne.s32.totalorder %s133, %s135
      %p142 = scmp.eq.s32.totalorder %s20, 1
      %p143 = por %p141, %p142
      %p144 = scmp.ne.s32.totalorder %s135, %s136
      %p145 = scmp.eq.s32.totalorder %s20, 0
      %p146 = por %p144, %p145
      %p147 = scmp.ne.s32.totalorder %s135, %s136
      %p148 = scmp.eq.s32.totalorder %s21, 1
      %p149 = por %p147, %p148
      %p151 = scmp.ne.s32.totalorder %s136, %s150
      %p152 = scmp.eq.s32.totalorder %s21, 0
      %p153 = por %p151, %p152
      %s155 = sadd.s32 %s154, 1
      %p158 = scmp.eq.s32.totalorder %s15, 1
      %p159 = scmp.ne.s32.totalorder %s154, %s156
      %p160 = scmp.eq.s32.totalorder %s15, 0
      %p161 = por %p159, %p160
      %p162 = scmp.ne.s32.totalorder %s154, %s156
      %p163 = scmp.eq.s32.totalorder %s20, 1
      %p164 = por %p162, %p163
      %p165 = scmp.ne.s32.totalorder %s156, %s157
      %p166 = scmp.eq.s32.totalorder %s20, 0
      %p167 = por %p165, %p166
      %p168 = scmp.ne.s32.totalorder %s156, %s157
      %p169 = scmp.eq.s32.totalorder %s21, 1
      %p170 = por %p168, %p169
      %p172 = scmp.ne.s32.totalorder %s157, %s171
      %p173 = scmp.eq.s32.totalorder %s21, 0
      %p174 = por %p172, %p173
      %s175 = ssub.s32 %s15, %s22
      %p176 = scmp.eq.s32.totalorder %s175, 0
      %s178 = sadd.s32 %s177, 1
      %s179 = scalar_select %p176, %s177, %s178
      %p182 = pneg %p176
      %p183 = scmp.eq.s32.totalorder %s15, 1
      %p184 = por %p182, %p183
      %p185 = scmp.ne.s32.totalorder %s177, %s180
      %p186 = scmp.eq.s32.totalorder %s15, 0
      %p187 = por %p185, %p186
      %p188 = scmp.ne.s32.totalorder %s177, %s180
      %p189 = scmp.eq.s32.totalorder %s20, 1
      %p190 = por %p188, %p189
      %p191 = scmp.ne.s32.totalorder %s180, %s181
      %p192 = scmp.eq.s32.totalorder %s20, 0
      %p193 = por %p191, %p192
      %p194 = scmp.ne.s32.totalorder %s180, %s181
      %p195 = scmp.eq.s32.totalorder %s21, 1
      %p196 = por %p194, %p195
      %p198 = scmp.ne.s32.totalorder %s181, %s197
      %p199 = scmp.eq.s32.totalorder %s21, 0
      %p200 = por %p198, %p199
      %p201 = scmp.le.s32.totalorder 1, %s15
      %p202 = scmp.lt.s32.totalorder %s15, 3
      %p203 = pnand %p201, %p202
      %p204 = pneg %p203
      // Predicated region
      $region9: #{tpu_custom_call.1} parent=5 // pred_check
        _
      $region10: #{tpu_custom_call.1} parent=5 // pred_check_branch
        %206 = sbr.rel (%p203) target = $region12
      $region11: #{tpu_custom_call.1} parent=5 // pred_region
        %s207 = ssub.s32 %s15, 1
        // Predicated region
        $region13: #{tpu_custom_call.1} parent=11 // pred_check
          %p208 = pneg %p62
        $region14: #{tpu_custom_call.1} parent=11 // pred_check_branch
          %210 = sbr.rel (%p208) target = $region16
        $region15: #{tpu_custom_call.1} parent=11 // pred_region
          _
        $region16: #{tpu_custom_call.1} parent=11 // pred_fallthru
          _
        // Predicated region
        $region17: #{tpu_custom_call.1} parent=11 // pred_check
          %p211 = pneg %p83
        $region18: #{tpu_custom_call.1} parent=11 // pred_check_branch
          %213 = sbr.rel (%p211) target = $region20
        $region19: #{tpu_custom_call.1} parent=11 // pred_region
          _
        $region20: #{tpu_custom_call.1} parent=11 // pred_fallthru
          _
        // Predicated region
        $region21: #{tpu_custom_call.1} parent=11 // pred_check
          %p214 = pneg %p104
        $region22: #{tpu_custom_call.1} parent=11 // pred_check_branch
          %216 = sbr.rel (%p214) target = $region24
        $region23: #{tpu_custom_call.1} parent=11 // pred_region
          _
        $region24: #{tpu_custom_call.1} parent=11 // pred_fallthru
          _
        // Predicated region
        $region25: #{tpu_custom_call.1} parent=11 // pred_check
          %p217 = pneg %p125
        $region26: #{tpu_custom_call.1} parent=11 // pred_check_branch
          %219 = sbr.rel (%p217) target = $region28
        $region27: #{tpu_custom_call.1} parent=11 // pred_region
          _
        $region28: #{tpu_custom_call.1} parent=11 // pred_fallthru
          _
        // Predicated region
        $region29: #{tpu_custom_call.1} parent=11 // pred_check
          %p220 = pneg %p146
        $region30: #{tpu_custom_call.1} parent=11 // pred_check_branch
          %222 = sbr.rel (%p220) target = $region32
        $region31: #{tpu_custom_call.1} parent=11 // pred_region
          _
        $region32: #{tpu_custom_call.1} parent=11 // pred_fallthru
          _
        // Predicated region
        $region33: #{tpu_custom_call.1} parent=11 // pred_check
          %p223 = pneg %p167
        $region34: #{tpu_custom_call.1} parent=11 // pred_check_branch
          %225 = sbr.rel (%p223) target = $region36
        $region35: #{tpu_custom_call.1} parent=11 // pred_region
          _
        $region36: #{tpu_custom_call.1} parent=11 // pred_fallthru
          _
      $region12: #{tpu_custom_call.1} parent=5 // pred_fallthru
        _
      %p226 = scmp.lt.s32.totalorder %s15, 2
      // Predicated region
      $region37: #{tpu_custom_call.1} parent=5 // pred_check
        %p227 = pneg %p226
      $region38: #{tpu_custom_call.1} parent=5 // pred_check_branch
        %229 = sbr.rel (%p227) target = $region40
      $region39: #{tpu_custom_call.1} parent=5 // pred_region
        // Predicated region
        $region41: #{tpu_custom_call.1} parent=39 // pred_check
          %p230 = pneg %p35
        $region42: #{tpu_custom_call.1} parent=39 // pred_check_branch
          %232 = sbr.rel (%p230) target = $region44
        $region43: #{tpu_custom_call.1} parent=39 // pred_region
          %s233 = smul.u32 63, %s15
          %s234 = ssub.s32 125, %s233
          %p235 = scmp.lt.s32.totalorder %s234, 63
          %s236 = scalar_select %p235, %s234, 63
          %s237 = smul.u32 128, %s236
          %s238 = smul.u32 %s237, 2
          %p239 = scmp.lt.s32.totalorder %s233, 124
          %s240 = scalar_select %p239, %s233, 124
          %s241 = smul.addr %s240, 2
          %s242 = smul.addr %s241, 8
          %s243 = scalar_lea.vmem %s0, %s242
          %s244 = smul.u32 63, %s15
          %s245 = ssub.s32 125, %s244
          %p246 = scmp.lt.s32.totalorder %s245, 63
          %s247 = scalar_select %p246, %s245, 63
          %s248 = smul.u32 128, %s247
          %s249 = smul.u32 %s248, 2
        $region44: #{tpu_custom_call.1} parent=39 // pred_fallthru
          _
      $region40: #{tpu_custom_call.1} parent=5 // pred_fallthru
        _
      %p250 = scmp.le.s32.totalorder 1, %s15
      %p251 = scmp.lt.s32.totalorder %s15, 3
      %p252 = pnand %p250, %p251
      %p253 = pneg %p252
      // Predicated region
      $region45: #{tpu_custom_call.1} parent=5 // pred_check
        _
      $region46: #{tpu_custom_call.1} parent=5 // pred_check_branch
        %255 = sbr.rel (%p252) target = $region48
      $region47: #{tpu_custom_call.1} parent=5 // pred_region
        %s256 = ssub.s32 %s15, 1
        %s257 = smul.u32 63, %s20
        %s258 = ssub.s32 125, %s257
        %p259 = scmp.lt.s32.totalorder %s258, 63
        %s260 = scalar_select %p259, %s258, 63
        %s261 = smul.u32 128, %s260
        %s262 = smul.u32 %s261, 2
        %p263 = scmp.lt.s32.totalorder %s257, 124
        %s264 = scalar_select %p263, %s257, 124
        %s265 = smul.addr %s264, 2
        %s266 = smul.addr %s265, 8
        %s267 = scalar_lea.vmem %s0, %s266
        %p268 = pneg %p41
        %p269 = pneg %p38
        %p270 = pneg %p62
        %p271 = pneg %p59
        %p272 = pneg %p83
        %p273 = pneg %p80
        %p274 = pneg %p104
        %p275 = pneg %p101
        %p276 = pneg %p125
        %p277 = pneg %p122
        %p278 = pneg %p146
        %p279 = pneg %p143
        %p280 = pneg %p167
        %p281 = pneg %p164
        %p282 = pneg %p193
        %p283 = pneg %p190
        %s284 = sand.u32 %s180, 1
        %s285 = sand.u32 %s180, 1
        %s286 = smul.addr %s285, 504
        %s287 = scalar_lea.vmem [#allocation3], %s286
        %s288 = smul.u32 63, %s20
        %s289 = ssub.s32 125, %s288
        %p290 = scmp.lt.s32.totalorder %s289, 63
        %s291 = scalar_select %p290, %s289, 63
        %s292 = smul.u32 128, %s291
        %s293 = smul.u32 %s292, 2
        %p294 = scmp.lt.s32.totalorder %s288, 124
        %s295 = scalar_select %p294, %s288, 124
        %s296 = smul.addr %s295, 2
        %s297 = smul.addr %s296, 8
        %s298 = scalar_lea.vmem %s0, %s297
        %s299 = smul.u32 63, %s20
        %s300 = ssub.s32 125, %s299
        %p301 = scmp.lt.s32.totalorder %s300, 63
        %s302 = scalar_select %p301, %s300, 63
        %s303 = smul.u32 128, %s302
        %s304 = smul.u32 %s303, 2
        %s305 = smul.u32 63, %s20
        %s306 = ssub.s32 125, %s305
        %p307 = scmp.lt.s32.totalorder %s306, 63
        %s308 = scalar_select %p307, %s306, 63
        %s309 = smul.u32 128, %s308
        %v310 = vld [vmem:[%s298] sm:$0xff]
        %v311 = vld [vmem:[%s298 + $0x8] sm:$0xff]
        %v312 = vld [vmem:[%s298 + $0x10] sm:$0xff]
        %v313 = vld [vmem:[%s298 + $0x18] sm:$0xff]
        %v314 = vld [vmem:[%s298 + $0x20] sm:$0xff]
        %v315 = vld [vmem:[%s298 + $0x28] sm:$0xff]
        %v316 = vld [vmem:[%s298 + $0x30] sm:$0xff]
        %v317 = vld [vmem:[%s298 + $0x38] sm:$0xff]
        %v318 = vld [vmem:[%s298 + $0x40] sm:$0xff]
        %v319 = vld [vmem:[%s298 + $0x48] sm:$0xff]
        %v320 = vld [vmem:[%s298 + $0x50] sm:$0xff]
        %v321 = vld [vmem:[%s298 + $0x58] sm:$0xff]
        %v322 = vld [vmem:[%s298 + $0x60] sm:$0xff]
        %v323 = vld [vmem:[%s298 + $0x68] sm:$0xff]
        %v324 = vld [vmem:[%s298 + $0x70] sm:$0xff]
        %v325 = vld [vmem:[%s298 + $0x78] sm:$0xff]
        %v326 = vld [vmem:[%s298 + $0x80] sm:$0xff]
        %v327 = vld [vmem:[%s298 + $0x88] sm:$0xff]
        %v328 = vld [vmem:[%s298 + $0x90] sm:$0xff]
        %v329 = vld [vmem:[%s298 + $0x98] sm:$0xff]
        %v330 = vld [vmem:[%s298 + $0xa0] sm:$0xff]
        %v331 = vld [vmem:[%s298 + $0xa8] sm:$0xff]
        %v332 = vld [vmem:[%s298 + $0xb0] sm:$0xff]
        %v333 = vld [vmem:[%s298 + $0xb8] sm:$0xff]
        %v334 = vld [vmem:[%s298 + $0xc0] sm:$0xff]
        %v335 = vld [vmem:[%s298 + $0xc8] sm:$0xff]
        %v336 = vld [vmem:[%s298 + $0xd0] sm:$0xff]
        %v337 = vld [vmem:[%s298 + $0xd8] sm:$0xff]
        %v338 = vld [vmem:[%s298 + $0xe0] sm:$0xff]
        %v339 = vld [vmem:[%s298 + $0xe8] sm:$0xff]
        %v340 = vld [vmem:[%s298 + $0xf0] sm:$0xff]
        %v341 = vld [vmem:[%s298 + $0xf8] sm:$0xff]
        %v342 = vld [vmem:[%s298 + $0x100] sm:$0xff]
        %v343 = vld [vmem:[%s298 + $0x108] sm:$0xff]
        %v344 = vld [vmem:[%s298 + $0x110] sm:$0xff]
        %v345 = vld [vmem:[%s298 + $0x118] sm:$0xff]
        %v346 = vld [vmem:[%s298 + $0x120] sm:$0xff]
        %v347 = vld [vmem:[%s298 + $0x128] sm:$0xff]
        %v348 = vld [vmem:[%s298 + $0x130] sm:$0xff]
        %v349 = vld [vmem:[%s298 + $0x138] sm:$0xff]
        %v350 = vld [vmem:[%s298 + $0x140] sm:$0xff]
        %v351 = vld [vmem:[%s298 + $0x148] sm:$0xff]
        %v352 = vld [vmem:[%s298 + $0x150] sm:$0xff]
        %v353 = vld [vmem:[%s298 + $0x158] sm:$0xff]
        %v354 = vld [vmem:[%s298 + $0x160] sm:$0xff]
        %v355 = vld [vmem:[%s298 + $0x168] sm:$0xff]
        %v356 = vld [vmem:[%s298 + $0x170] sm:$0xff]
        %v357 = vld [vmem:[%s298 + $0x178] sm:$0xff]
        %v358 = vld [vmem:[%s298 + $0x180] sm:$0xff]
        %v359 = vld [vmem:[%s298 + $0x188] sm:$0xff]
        %v360 = vld [vmem:[%s298 + $0x190] sm:$0xff]
        %v361 = vld [vmem:[%s298 + $0x198] sm:$0xff]
        %v362 = vld [vmem:[%s298 + $0x1a0] sm:$0xff]
        %v363 = vld [vmem:[%s298 + $0x1a8] sm:$0xff]
        %v364 = vld [vmem:[%s298 + $0x1b0] sm:$0xff]
        %v365 = vld [vmem:[%s298 + $0x1b8] sm:$0xff]
        %v366 = vld [vmem:[%s298 + $0x1c0] sm:$0xff]
        %v367 = vld [vmem:[%s298 + $0x1c8] sm:$0xff]
        %v368 = vld [vmem:[%s298 + $0x1d0] sm:$0xff]
        %v369 = vld [vmem:[%s298 + $0x1d8] sm:$0xff]
        %v370 = vld [vmem:[%s298 + $0x1e0] sm:$0xff]
        %v371 = vld [vmem:[%s298 + $0x1e8] sm:$0xff]
        %v372 = vld [vmem:[%s298 + $0x1f0] sm:$0xff]
        %v373 = vld [vmem:[%s298 + $0x1f8] sm:$0xff]
        %v374 = vld [vmem:[%s298 + $0x200] sm:$0xff]
        %v375 = vld [vmem:[%s298 + $0x208] sm:$0xff]
        %v376 = vld [vmem:[%s298 + $0x210] sm:$0xff]
        %v377 = vld [vmem:[%s298 + $0x218] sm:$0xff]
        %v378 = vld [vmem:[%s298 + $0x220] sm:$0xff]
        %v379 = vld [vmem:[%s298 + $0x228] sm:$0xff]
        %v380 = vld [vmem:[%s298 + $0x230] sm:$0xff]
        %v381 = vld [vmem:[%s298 + $0x238] sm:$0xff]
        %v382 = vld [vmem:[%s298 + $0x240] sm:$0xff]
        %v383 = vld [vmem:[%s298 + $0x248] sm:$0xff]
        %v384 = vld [vmem:[%s298 + $0x250] sm:$0xff]
        %v385 = vld [vmem:[%s298 + $0x258] sm:$0xff]
        %v386 = vld [vmem:[%s298 + $0x260] sm:$0xff]
        %v387 = vld [vmem:[%s298 + $0x268] sm:$0xff]
        %v388 = vld [vmem:[%s298 + $0x270] sm:$0xff]
        %v389 = vld [vmem:[%s298 + $0x278] sm:$0xff]
        %v390 = vld [vmem:[%s298 + $0x280] sm:$0xff]
        %v391 = vld [vmem:[%s298 + $0x288] sm:$0xff]
        %v392 = vld [vmem:[%s298 + $0x290] sm:$0xff]
        %v393 = vld [vmem:[%s298 + $0x298] sm:$0xff]
        %v394 = vld [vmem:[%s298 + $0x2a0] sm:$0xff]
        %v395 = vld [vmem:[%s298 + $0x2a8] sm:$0xff]
        %v396 = vld [vmem:[%s298 + $0x2b0] sm:$0xff]
        %v397 = vld [vmem:[%s298 + $0x2b8] sm:$0xff]
        %v398 = vld [vmem:[%s298 + $0x2c0] sm:$0xff]
        %v399 = vld [vmem:[%s298 + $0x2c8] sm:$0xff]
        %v400 = vld [vmem:[%s298 + $0x2d0] sm:$0xff]
        %v401 = vld [vmem:[%s298 + $0x2d8] sm:$0xff]
        %v402 = vld [vmem:[%s298 + $0x2e0] sm:$0xff]
        %v403 = vld [vmem:[%s298 + $0x2e8] sm:$0xff]
        %v404 = vld [vmem:[%s298 + $0x2f0] sm:$0xff]
        %v405 = vld [vmem:[%s298 + $0x2f8] sm:$0xff]
        %v406 = vld [vmem:[%s298 + $0x300] sm:$0xff]
        %v407 = vld [vmem:[%s298 + $0x308] sm:$0xff]
        %v408 = vld [vmem:[%s298 + $0x310] sm:$0xff]
        %v409 = vld [vmem:[%s298 + $0x318] sm:$0xff]
        %v410 = vld [vmem:[%s298 + $0x320] sm:$0xff]
        %v411 = vld [vmem:[%s298 + $0x328] sm:$0xff]
        %v412 = vld [vmem:[%s298 + $0x330] sm:$0xff]
        %v413 = vld [vmem:[%s298 + $0x338] sm:$0xff]
        %v414 = vld [vmem:[%s298 + $0x340] sm:$0xff]
        %v415 = vld [vmem:[%s298 + $0x348] sm:$0xff]
        %v416 = vld [vmem:[%s298 + $0x350] sm:$0xff]
        %v417 = vld [vmem:[%s298 + $0x358] sm:$0xff]
        %v418 = vld [vmem:[%s298 + $0x360] sm:$0xff]
        %v419 = vld [vmem:[%s298 + $0x368] sm:$0xff]
        %v420 = vld [vmem:[%s298 + $0x370] sm:$0xff]
        %v421 = vld [vmem:[%s298 + $0x378] sm:$0xff]
        %v422 = vld [vmem:[%s298 + $0x380] sm:$0xff]
        %v423 = vld [vmem:[%s298 + $0x388] sm:$0xff]
        %v424 = vld [vmem:[%s298 + $0x390] sm:$0xff]
        %v425 = vld [vmem:[%s298 + $0x398] sm:$0xff]
        %v426 = vld [vmem:[%s298 + $0x3a0] sm:$0xff]
        %v427 = vld [vmem:[%s298 + $0x3a8] sm:$0xff]
        %v428 = vld [vmem:[%s298 + $0x3b0] sm:$0xff]
        %v429 = vld [vmem:[%s298 + $0x3b8] sm:$0xff]
        %v430 = vld [vmem:[%s298 + $0x3c0] sm:$0xff]
        %v431 = vld [vmem:[%s298 + $0x3c8] sm:$0xff]
        %v432 = vld [vmem:[%s298 + $0x3d0] sm:$0xff]
        %v433 = vld [vmem:[%s298 + $0x3d8] sm:$0xff]
        %v434 = vld [vmem:[%s298 + $0x3e0] sm:$0xff]
        %v435 = vld [vmem:[%s298 + $0x3e8] sm:$0xff]
        %v436 = vld [vmem:[%s1] sm:$0xff]
        %v437 = vld [vmem:[%s1 + $0x8] sm:$0xff]
        %v438 = vld [vmem:[%s1 + $0x10] sm:$0xff]
        %v439 = vld [vmem:[%s1 + $0x18] sm:$0xff]
        %v440 = vld [vmem:[%s1 + $0x20] sm:$0xff]
        %v441 = vld [vmem:[%s1 + $0x28] sm:$0xff]
        %v442 = vld [vmem:[%s1 + $0x30] sm:$0xff]
        %v443 = vld [vmem:[%s1 + $0x38] sm:$0xff]
        %v444 = vld [vmem:[%s1 + $0x40] sm:$0xff]
        %v445 = vld [vmem:[%s1 + $0x48] sm:$0xff]
        %v446 = vld [vmem:[%s1 + $0x50] sm:$0xff]
        %v447 = vld [vmem:[%s1 + $0x58] sm:$0xff]
        %v448 = vld [vmem:[%s1 + $0x60] sm:$0xff]
        %v449 = vld [vmem:[%s1 + $0x68] sm:$0xff]
        %v450 = vld [vmem:[%s1 + $0x70] sm:$0xff]
        %v451 = vld [vmem:[%s1 + $0x78] sm:$0xff]
        %v452 = vld [vmem:[%s1 + $0x80] sm:$0xff]
        %v453 = vld [vmem:[%s1 + $0x88] sm:$0xff]
        %v454 = vld [vmem:[%s1 + $0x90] sm:$0x7]
        %v455 = vld [vmem:[%s2] sm:$0x1]
        %v457 = vlaneseq
        %v458 = vshrl.u32 %v457, 7
        %v459 = vsub.s32 0, %v458
        %v460 = vrot.slane %v455, %v459
        %vm462 = vcmask 154624
        %v464 = vsel %vm462, %v311, 0
        %v467 = vsel %vm462, %v313, 0
        %v470 = vsel %vm462, %v315, 0
        %v473 = vsel %vm462, %v317, 0
        %v476 = vsel %vm462, %v319, 0
        %v479 = vsel %vm462, %v321, 0
        %v482 = vsel %vm462, %v323, 0
        %v485 = vsel %vm462, %v325, 0
        %v488 = vsel %vm462, %v327, 0
        %v491 = vsel %vm462, %v329, 0
        %v494 = vsel %vm462, %v331, 0
        %v497 = vsel %vm462, %v333, 0
        %v500 = vsel %vm462, %v335, 0
        %v503 = vsel %vm462, %v337, 0
        %v506 = vsel %vm462, %v339, 0
        %v509 = vsel %vm462, %v341, 0
        %v512 = vsel %vm462, %v343, 0
        %v515 = vsel %vm462, %v345, 0
        %v518 = vsel %vm462, %v347, 0
        %v521 = vsel %vm462, %v349, 0
        %v524 = vsel %vm462, %v351, 0
        %v527 = vsel %vm462, %v353, 0
        %v530 = vsel %vm462, %v355, 0
        %v533 = vsel %vm462, %v357, 0
        %v536 = vsel %vm462, %v359, 0
        %v539 = vsel %vm462, %v361, 0
        %v542 = vsel %vm462, %v363, 0
        %v545 = vsel %vm462, %v365, 0
        %v548 = vsel %vm462, %v367, 0
        %v551 = vsel %vm462, %v369, 0
        %v554 = vsel %vm462, %v371, 0
        %v557 = vsel %vm462, %v373, 0
        %v560 = vsel %vm462, %v375, 0
        %v563 = vsel %vm462, %v377, 0
        %v566 = vsel %vm462, %v379, 0
        %v569 = vsel %vm462, %v381, 0
        %v572 = vsel %vm462, %v383, 0
        %v575 = vsel %vm462, %v385, 0
        %v578 = vsel %vm462, %v387, 0
        %v581 = vsel %vm462, %v389, 0
        %v584 = vsel %vm462, %v391, 0
        %v587 = vsel %vm462, %v393, 0
        %v590 = vsel %vm462, %v395, 0
        %v593 = vsel %vm462, %v397, 0
        %v596 = vsel %vm462, %v399, 0
        %v599 = vsel %vm462, %v401, 0
        %v602 = vsel %vm462, %v403, 0
        %v605 = vsel %vm462, %v405, 0
        %v608 = vsel %vm462, %v407, 0
        %v611 = vsel %vm462, %v409, 0
        %v614 = vsel %vm462, %v411, 0
        %v617 = vsel %vm462, %v413, 0
        %v620 = vsel %vm462, %v415, 0
        %v623 = vsel %vm462, %v417, 0
        %v626 = vsel %vm462, %v419, 0
        %v629 = vsel %vm462, %v421, 0
        %v632 = vsel %vm462, %v423, 0
        %v635 = vsel %vm462, %v425, 0
        %v638 = vsel %vm462, %v427, 0
        %v641 = vsel %vm462, %v429, 0
        %v644 = vsel %vm462, %v431, 0
        %v647 = vsel %vm462, %v433, 0
        %v650 = vsel %vm462, %v435, 0
        %vm652 = vcmask 1042432
        %v654 = vsel %vm652, %v454, 0
        %656 = vmatprep.subr.mxu0 0.0
        %657 = vmatpush1.msra.mxu0 %v451
        %658 = vmatprep.subr.mxu0 0.0
        %659 = vmatpush1.msra.mxu0 %v450
        %660 = vmatprep.subr.mxu0 0.0
        %661 = vmatpush1.msra.mxu0 %v449
        %662 = vmatprep.subr.mxu0 0.0
        %663 = vmatpush1.msra.mxu0 %v448
        %664 = vmatprep.subr.mxu0 0.0
        %665 = vmatpush1.msra.mxu0 %v447
        %666 = vmatprep.subr.mxu0 0.0
        %667 = vmatpush1.msra.mxu0 %v446
        %668 = vmatprep.subr.mxu0 0.0
        %669 = vmatpush1.msra.mxu0 %v445
        %670 = vmatprep.subr.mxu0 0.0
        %671 = vmatpush1.msra.mxu0 %v444
        %672 = vmatprep.subr.mxu0 0.0
        %673 = vmatpush1.msra.mxu0 %v443
        %674 = vmatprep.subr.mxu0 0.0
        %675 = vmatpush1.msra.mxu0 %v442
        %676 = vmatprep.subr.mxu0 0.0
        %677 = vmatpush1.msra.mxu0 %v441
        %678 = vmatprep.subr.mxu0 0.0
        %679 = vmatpush1.msra.mxu0 %v440
        %680 = vmatprep.subr.mxu0 0.0
        %681 = vmatpush1.msra.mxu0 %v439
        %682 = vmatprep.subr.mxu0 0.0
        %683 = vmatpush1.msra.mxu0 %v438
        %684 = vmatprep.subr.mxu0 0.0
        %685 = vmatpush1.msra.mxu0 %v437
        %686 = vmatprep.subr.mxu0 0.0
        %687 = vmatpush1.msra.mxu0 %v436
        %688 = vmatprep.subr.mxu0 0.0
        %689 = vmatpush2.msra.mxu0 0.0
        %690 = vmatprep.subr.mxu0 0.0
        %691 = vmatpush2.msra.mxu0 0.0
        %692 = vmatprep.subr.mxu0 0.0
        %693 = vmatpush2.msra.mxu0 0.0
        %694 = vmatprep.subr.mxu0 0.0
        %695 = vmatpush2.msra.mxu0 0.0
        %696 = vmatprep.subr.mxu0 0.0
        %697 = vmatpush2.msra.mxu0 0.0
        %698 = vmatprep.subr.mxu0 0.0
        %699 = vmatpush2.msra.mxu0 0.0
        %700 = vmatprep.subr.mxu0 0.0
        %701 = vmatpush2.msra.mxu0 0.0
        %702 = vmatprep.subr.mxu0 0.0
        %703 = vmatpush2.msra.mxu0 0.0
        %704 = vmatprep.subr.mxu0 0.0
        %705 = vmatpush2.msra.mxu0 0.0
        %706 = vmatprep.subr.mxu0 0.0
        %707 = vmatpush2.msra.mxu0 0.0
        %708 = vmatprep.subr.mxu0 0.0
        %709 = vmatpush2.msra.mxu0 0.0
        %710 = vmatprep.subr.mxu0 0.0
        %711 = vmatpush2.msra.mxu0 0.0
        %712 = vmatprep.subr.mxu0 0.0
        %713 = vmatpush2.msra.mxu0 0.0
        %714 = vmatprep.subr.mxu0 0.0
        %715 = vmatpush2.msra.mxu0 %v654
        %716 = vmatprep.subr.mxu0 0.0
        %717 = vmatpush2.msra.mxu0 %v453
        %718 = vmatprep.subr.mxu0 0.0
        %719 = vmatpush2.msra.mxu0 %v452
        %720 = vmatprep.mubr.f32.mxu0 %v464
        %721 = vmatmul.mubr.f32.gmra.mxu0 %v310
        %v722 = vpop.f32.mrf.mxu0
        %v723 = vadd.f32 %v460, %v722
        %v724 = vpop.f32.mrf.mxu0
        %725 = vmatprep.mubr.f32.mxu0 %v467
        %726 = vmatmul.mubr.f32.gmra.mxu0 %v312
        %v727 = vpop.f32.mrf.mxu0
        %v728 = vadd.f32 %v460, %v727
        %v729 = vpop.f32.mrf.mxu0
        %730 = vmatprep.mubr.f32.mxu0 %v470
        %731 = vmatmul.mubr.f32.gmra.mxu0 %v314
        %v732 = vpop.f32.mrf.mxu0
        %v733 = vadd.f32 %v460, %v732
        %v734 = vpop.f32.mrf.mxu0
        %735 = vmatprep.mubr.f32.mxu0 %v473
        %736 = vmatmul.mubr.f32.gmra.mxu0 %v316
        %v737 = vpop.f32.mrf.mxu0
        %v738 = vadd.f32 %v460, %v737
        %v739 = vpop.f32.mrf.mxu0
        %740 = vmatprep.mubr.f32.mxu0 %v476
        %741 = vmatmul.mubr.f32.gmra.mxu0 %v318
        %v742 = vpop.f32.mrf.mxu0
        %v743 = vadd.f32 %v460, %v742
        %v744 = vpop.f32.mrf.mxu0
        %745 = vmatprep.mubr.f32.mxu0 %v479
        %746 = vmatmul.mubr.f32.gmra.mxu0 %v320
        %v747 = vpop.f32.mrf.mxu0
        %v748 = vadd.f32 %v460, %v747
        %v749 = vpop.f32.mrf.mxu0
        %750 = vmatprep.mubr.f32.mxu0 %v482
        %751 = vmatmul.mubr.f32.gmra.mxu0 %v322
        %v752 = vpop.f32.mrf.mxu0
        %v753 = vadd.f32 %v460, %v752
        %v754 = vpop.f32.mrf.mxu0
        %755 = vmatprep.mubr.f32.mxu0 %v485
        %756 = vmatmul.mubr.f32.gmra.mxu0 %v324
        %v757 = vpop.f32.mrf.mxu0
        %v758 = vadd.f32 %v460, %v757
        %v759 = vpop.f32.mrf.mxu0
        %760 = vmatprep.mubr.f32.mxu0 %v488
        %761 = vmatmul.mubr.f32.gmra.mxu0 %v326
        %v762 = vpop.f32.mrf.mxu0
        %v763 = vadd.f32 %v460, %v762
        %v764 = vpop.f32.mrf.mxu0
        %765 = vmatprep.mubr.f32.mxu0 %v491
        %766 = vmatmul.mubr.f32.gmra.mxu0 %v328
        %v767 = vpop.f32.mrf.mxu0
        %v768 = vadd.f32 %v460, %v767
        %v769 = vpop.f32.mrf.mxu0
        %770 = vmatprep.mubr.f32.mxu0 %v494
        %771 = vmatmul.mubr.f32.gmra.mxu0 %v330
        %v772 = vpop.f32.mrf.mxu0
        %v773 = vadd.f32 %v460, %v772
        %v774 = vpop.f32.mrf.mxu0
        %775 = vmatprep.mubr.f32.mxu0 %v497
        %776 = vmatmul.mubr.f32.gmra.mxu0 %v332
        %v777 = vpop.f32.mrf.mxu0
        %v778 = vadd.f32 %v460, %v777
        %v779 = vpop.f32.mrf.mxu0
        %780 = vmatprep.mubr.f32.mxu0 %v500
        %781 = vmatmul.mubr.f32.gmra.mxu0 %v334
        %v782 = vpop.f32.mrf.mxu0
        %v783 = vadd.f32 %v460, %v782
        %v784 = vpop.f32.mrf.mxu0
        %785 = vmatprep.mubr.f32.mxu0 %v503
        %786 = vmatmul.mubr.f32.gmra.mxu0 %v336
        %v787 = vpop.f32.mrf.mxu0
        %v788 = vadd.f32 %v460, %v787
        %v789 = vpop.f32.mrf.mxu0
        %790 = vmatprep.mubr.f32.mxu0 %v506
        %791 = vmatmul.mubr.f32.gmra.mxu0 %v338
        %v792 = vpop.f32.mrf.mxu0
        %v793 = vadd.f32 %v460, %v792
        %v794 = vpop.f32.mrf.mxu0
        %795 = vmatprep.mubr.f32.mxu0 %v509
        %796 = vmatmul.mubr.f32.gmra.mxu0 %v340
        %v797 = vpop.f32.mrf.mxu0
        %v798 = vadd.f32 %v460, %v797
        %v799 = vpop.f32.mrf.mxu0
        %800 = vmatprep.mubr.f32.mxu0 %v512
        %801 = vmatmul.mubr.f32.gmra.mxu0 %v342
        %v802 = vpop.f32.mrf.mxu0
        %v803 = vadd.f32 %v460, %v802
        %v804 = vpop.f32.mrf.mxu0
        %805 = vmatprep.mubr.f32.mxu0 %v515
        %806 = vmatmul.mubr.f32.gmra.mxu0 %v344
        %v807 = vpop.f32.mrf.mxu0
        %v808 = vadd.f32 %v460, %v807
        %v809 = vpop.f32.mrf.mxu0
        %810 = vmatprep.mubr.f32.mxu0 %v518
        %811 = vmatmul.mubr.f32.gmra.mxu0 %v346
        %v812 = vpop.f32.mrf.mxu0
        %v813 = vadd.f32 %v460, %v812
        %v814 = vpop.f32.mrf.mxu0
        %815 = vmatprep.mubr.f32.mxu0 %v521
        %816 = vmatmul.mubr.f32.gmra.mxu0 %v348
        %v817 = vpop.f32.mrf.mxu0
        %v818 = vadd.f32 %v460, %v817
        %v819 = vpop.f32.mrf.mxu0
        %820 = vmatprep.mubr.f32.mxu0 %v524
        %821 = vmatmul.mubr.f32.gmra.mxu0 %v350
        %v822 = vpop.f32.mrf.mxu0
        %v823 = vadd.f32 %v460, %v822
        %v824 = vpop.f32.mrf.mxu0
        %825 = vmatprep.mubr.f32.mxu0 %v527
        %826 = vmatmul.mubr.f32.gmra.mxu0 %v352
        %v827 = vpop.f32.mrf.mxu0
        %v828 = vadd.f32 %v460, %v827
        %v829 = vpop.f32.mrf.mxu0
        %830 = vmatprep.mubr.f32.mxu0 %v530
        %831 = vmatmul.mubr.f32.gmra.mxu0 %v354
        %v832 = vpop.f32.mrf.mxu0
        %v833 = vadd.f32 %v460, %v832
        %v834 = vpop.f32.mrf.mxu0
        %835 = vmatprep.mubr.f32.mxu0 %v533
        %836 = vmatmul.mubr.f32.gmra.mxu0 %v356
        %v837 = vpop.f32.mrf.mxu0
        %v838 = vadd.f32 %v460, %v837
        %v839 = vpop.f32.mrf.mxu0
        %840 = vmatprep.mubr.f32.mxu0 %v536
        %841 = vmatmul.mubr.f32.gmra.mxu0 %v358
        %v842 = vpop.f32.mrf.mxu0
        %v843 = vadd.f32 %v460, %v842
        %v844 = vpop.f32.mrf.mxu0
        %845 = vmatprep.mubr.f32.mxu0 %v539
        %846 = vmatmul.mubr.f32.gmra.mxu0 %v360
        %v847 = vpop.f32.mrf.mxu0
        %v848 = vadd.f32 %v460, %v847
        %v849 = vpop.f32.mrf.mxu0
        %850 = vmatprep.mubr.f32.mxu0 %v542
        %851 = vmatmul.mubr.f32.gmra.mxu0 %v362
        %v852 = vpop.f32.mrf.mxu0
        %v853 = vadd.f32 %v460, %v852
        %v854 = vpop.f32.mrf.mxu0
        %855 = vmatprep.mubr.f32.mxu0 %v545
        %856 = vmatmul.mubr.f32.gmra.mxu0 %v364
        %v857 = vpop.f32.mrf.mxu0
        %v858 = vadd.f32 %v460, %v857
        %v859 = vpop.f32.mrf.mxu0
        %860 = vmatprep.mubr.f32.mxu0 %v548
        %861 = vmatmul.mubr.f32.gmra.mxu0 %v366
        %v862 = vpop.f32.mrf.mxu0
        %v863 = vadd.f32 %v460, %v862
        %v864 = vpop.f32.mrf.mxu0
        %865 = vmatprep.mubr.f32.mxu0 %v551
        %866 = vmatmul.mubr.f32.gmra.mxu0 %v368
        %v867 = vpop.f32.mrf.mxu0
        %v868 = vadd.f32 %v460, %v867
        %v869 = vpop.f32.mrf.mxu0
        %870 = vmatprep.mubr.f32.mxu0 %v554
        %871 = vmatmul.mubr.f32.gmra.mxu0 %v370
        %v872 = vpop.f32.mrf.mxu0
        %v873 = vadd.f32 %v460, %v872
        %v874 = vpop.f32.mrf.mxu0
        %875 = vmatprep.mubr.f32.mxu0 %v557
        %876 = vmatmul.mubr.f32.gmra.mxu0 %v372
        %v877 = vpop.f32.mrf.mxu0
        %v878 = vadd.f32 %v460, %v877
        %v879 = vpop.f32.mrf.mxu0
        %880 = vmatprep.mubr.f32.mxu0 %v560
        %881 = vmatmul.mubr.f32.gmra.mxu0 %v374
        %v882 = vpop.f32.mrf.mxu0
        %v883 = vadd.f32 %v460, %v882
        %v884 = vpop.f32.mrf.mxu0
        %885 = vmatprep.mubr.f32.mxu0 %v563
        %886 = vmatmul.mubr.f32.gmra.mxu0 %v376
        %v887 = vpop.f32.mrf.mxu0
        %v888 = vadd.f32 %v460, %v887
        %v889 = vpop.f32.mrf.mxu0
        %890 = vmatprep.mubr.f32.mxu0 %v566
        %891 = vmatmul.mubr.f32.gmra.mxu0 %v378
        %v892 = vpop.f32.mrf.mxu0
        %v893 = vadd.f32 %v460, %v892
        %v894 = vpop.f32.mrf.mxu0
        %895 = vmatprep.mubr.f32.mxu0 %v569
        %896 = vmatmul.mubr.f32.gmra.mxu0 %v380
        %v897 = vpop.f32.mrf.mxu0
        %v898 = vadd.f32 %v460, %v897
        %v899 = vpop.f32.mrf.mxu0
        %900 = vmatprep.mubr.f32.mxu0 %v572
        %901 = vmatmul.mubr.f32.gmra.mxu0 %v382
        %v902 = vpop.f32.mrf.mxu0
        %v903 = vadd.f32 %v460, %v902
        %v904 = vpop.f32.mrf.mxu0
        %905 = vmatprep.mubr.f32.mxu0 %v575
        %906 = vmatmul.mubr.f32.gmra.mxu0 %v384
        %v907 = vpop.f32.mrf.mxu0
        %v908 = vadd.f32 %v460, %v907
        %v909 = vpop.f32.mrf.mxu0
        %910 = vmatprep.mubr.f32.mxu0 %v578
        %911 = vmatmul.mubr.f32.gmra.mxu0 %v386
        %v912 = vpop.f32.mrf.mxu0
        %v913 = vadd.f32 %v460, %v912
        %v914 = vpop.f32.mrf.mxu0
        %915 = vmatprep.mubr.f32.mxu0 %v581
        %916 = vmatmul.mubr.f32.gmra.mxu0 %v388
        %v917 = vpop.f32.mrf.mxu0
        %v918 = vadd.f32 %v460, %v917
        %v919 = vpop.f32.mrf.mxu0
        %920 = vmatprep.mubr.f32.mxu0 %v584
        %921 = vmatmul.mubr.f32.gmra.mxu0 %v390
        %v922 = vpop.f32.mrf.mxu0
        %v923 = vadd.f32 %v460, %v922
        %v924 = vpop.f32.mrf.mxu0
        %925 = vmatprep.mubr.f32.mxu0 %v587
        %926 = vmatmul.mubr.f32.gmra.mxu0 %v392
        %v927 = vpop.f32.mrf.mxu0
        %v928 = vadd.f32 %v460, %v927
        %v929 = vpop.f32.mrf.mxu0
        %930 = vmatprep.mubr.f32.mxu0 %v590
        %931 = vmatmul.mubr.f32.gmra.mxu0 %v394
        %v932 = vpop.f32.mrf.mxu0
        %v933 = vadd.f32 %v460, %v932
        %v934 = vpop.f32.mrf.mxu0
        %935 = vmatprep.mubr.f32.mxu0 %v593
        %936 = vmatmul.mubr.f32.gmra.mxu0 %v396
        %v937 = vpop.f32.mrf.mxu0
        %v938 = vadd.f32 %v460, %v937
        %v939 = vpop.f32.mrf.mxu0
        %940 = vmatprep.mubr.f32.mxu0 %v596
        %941 = vmatmul.mubr.f32.gmra.mxu0 %v398
        %v942 = vpop.f32.mrf.mxu0
        %v943 = vadd.f32 %v460, %v942
        %v944 = vpop.f32.mrf.mxu0
        %945 = vmatprep.mubr.f32.mxu0 %v599
        %946 = vmatmul.mubr.f32.gmra.mxu0 %v400
        %v947 = vpop.f32.mrf.mxu0
        %v948 = vadd.f32 %v460, %v947
        %v949 = vpop.f32.mrf.mxu0
        %950 = vmatprep.mubr.f32.mxu0 %v602
        %951 = vmatmul.mubr.f32.gmra.mxu0 %v402
        %v952 = vpop.f32.mrf.mxu0
        %v953 = vadd.f32 %v460, %v952
        %v954 = vpop.f32.mrf.mxu0
        %955 = vmatprep.mubr.f32.mxu0 %v605
        %956 = vmatmul.mubr.f32.gmra.mxu0 %v404
        %v957 = vpop.f32.mrf.mxu0
        %v958 = vadd.f32 %v460, %v957
        %v959 = vpop.f32.mrf.mxu0
        %960 = vmatprep.mubr.f32.mxu0 %v608
        %961 = vmatmul.mubr.f32.gmra.mxu0 %v406
        %v962 = vpop.f32.mrf.mxu0
        %v963 = vadd.f32 %v460, %v962
        %v964 = vpop.f32.mrf.mxu0
        %965 = vmatprep.mubr.f32.mxu0 %v611
        %966 = vmatmul.mubr.f32.gmra.mxu0 %v408
        %v967 = vpop.f32.mrf.mxu0
        %v968 = vadd.f32 %v460, %v967
        %v969 = vpop.f32.mrf.mxu0
        %970 = vmatprep.mubr.f32.mxu0 %v614
        %971 = vmatmul.mubr.f32.gmra.mxu0 %v410
        %v972 = vpop.f32.mrf.mxu0
        %v973 = vadd.f32 %v460, %v972
        %v974 = vpop.f32.mrf.mxu0
        %975 = vmatprep.mubr.f32.mxu0 %v617
        %976 = vmatmul.mubr.f32.gmra.mxu0 %v412
        %v977 = vpop.f32.mrf.mxu0
        %v978 = vadd.f32 %v460, %v977
        %v979 = vpop.f32.mrf.mxu0
        %980 = vmatprep.mubr.f32.mxu0 %v620
        %981 = vmatmul.mubr.f32.gmra.mxu0 %v414
        %v982 = vpop.f32.mrf.mxu0
        %v983 = vadd.f32 %v460, %v982
        %v984 = vpop.f32.mrf.mxu0
        %985 = vmatprep.mubr.f32.mxu0 %v623
        %986 = vmatmul.mubr.f32.gmra.mxu0 %v416
        %v987 = vpop.f32.mrf.mxu0
        %v988 = vadd.f32 %v460, %v987
        %v989 = vpop.f32.mrf.mxu0
        %990 = vmatprep.mubr.f32.mxu0 %v626
        %991 = vmatmul.mubr.f32.gmra.mxu0 %v418
        %v992 = vpop.f32.mrf.mxu0
        %v993 = vadd.f32 %v460, %v992
        %v994 = vpop.f32.mrf.mxu0
        %995 = vmatprep.mubr.f32.mxu0 %v629
        %996 = vmatmul.mubr.f32.gmra.mxu0 %v420
        %v997 = vpop.f32.mrf.mxu0
        %v998 = vadd.f32 %v460, %v997
        %v999 = vpop.f32.mrf.mxu0
        %1000 = vmatprep.mubr.f32.mxu0 %v632
        %1001 = vmatmul.mubr.f32.gmra.mxu0 %v422
        %v1002 = vpop.f32.mrf.mxu0
        %v1003 = vadd.f32 %v460, %v1002
        %v1004 = vpop.f32.mrf.mxu0
        %1005 = vmatprep.mubr.f32.mxu0 %v635
        %1006 = vmatmul.mubr.f32.gmra.mxu0 %v424
        %v1007 = vpop.f32.mrf.mxu0
        %v1008 = vadd.f32 %v460, %v1007
        %v1009 = vpop.f32.mrf.mxu0
        %1010 = vmatprep.mubr.f32.mxu0 %v638
        %1011 = vmatmul.mubr.f32.gmra.mxu0 %v426
        %v1012 = vpop.f32.mrf.mxu0
        %v1013 = vadd.f32 %v460, %v1012
        %v1014 = vpop.f32.mrf.mxu0
        %1015 = vmatprep.mubr.f32.mxu0 %v641
        %1016 = vmatmul.mubr.f32.gmra.mxu0 %v428
        %v1017 = vpop.f32.mrf.mxu0
        %v1018 = vadd.f32 %v460, %v1017
        %v1019 = vpop.f32.mrf.mxu0
        %1020 = vmatprep.mubr.f32.mxu0 %v644
        %1021 = vmatmul.mubr.f32.gmra.mxu0 %v430
        %v1022 = vpop.f32.mrf.mxu0
        %v1023 = vadd.f32 %v460, %v1022
        %v1024 = vpop.f32.mrf.mxu0
        %1025 = vmatprep.mubr.f32.mxu0 %v647
        %1026 = vmatmul.mubr.f32.gmra.mxu0 %v432
        %v1027 = vpop.f32.mrf.mxu0
        %v1028 = vadd.f32 %v460, %v1027
        %v1029 = vpop.f32.mrf.mxu0
        %1030 = vmatprep.mubr.f32.mxu0 %v650
        %1031 = vmatmul.mubr.f32.gmra.mxu0 %v434
        %v1032 = vpop.f32.mrf.mxu0
        %v1033 = vadd.f32 %v460, %v1032
        %v1034 = vpop.f32.mrf.mxu0
        %1035 = vdwg.mxu0
        %v1036 = vmax.f32 %v723, 0.0
        %v1037 = vmax.f32 %v728, 0.0
        %v1038 = vmax.f32 %v733, 0.0
        %v1039 = vmax.f32 %v738, 0.0
        %v1040 = vmax.f32 %v743, 0.0
        %v1041 = vmax.f32 %v748, 0.0
        %v1042 = vmax.f32 %v753, 0.0
        %v1043 = vmax.f32 %v758, 0.0
        %v1044 = vmax.f32 %v763, 0.0
        %v1045 = vmax.f32 %v768, 0.0
        %v1046 = vmax.f32 %v773, 0.0
        %v1047 = vmax.f32 %v778, 0.0
        %v1048 = vmax.f32 %v783, 0.0
        %v1049 = vmax.f32 %v788, 0.0
        %v1050 = vmax.f32 %v793, 0.0
        %v1051 = vmax.f32 %v798, 0.0
        %v1052 = vmax.f32 %v803, 0.0
        %v1053 = vmax.f32 %v808, 0.0
        %v1054 = vmax.f32 %v813, 0.0
        %v1055 = vmax.f32 %v818, 0.0
        %v1056 = vmax.f32 %v823, 0.0
        %v1057 = vmax.f32 %v828, 0.0
        %v1058 = vmax.f32 %v833, 0.0
        %v1059 = vmax.f32 %v838, 0.0
        %v1060 = vmax.f32 %v843, 0.0
        %v1061 = vmax.f32 %v848, 0.0
        %v1062 = vmax.f32 %v853, 0.0
        %v1063 = vmax.f32 %v858, 0.0
        %v1064 = vmax.f32 %v863, 0.0
        %v1065 = vmax.f32 %v868, 0.0
        %v1066 = vmax.f32 %v873, 0.0
        %v1067 = vmax.f32 %v878, 0.0
        %v1068 = vmax.f32 %v883, 0.0
        %v1069 = vmax.f32 %v888, 0.0
        %v1070 = vmax.f32 %v893, 0.0
        %v1071 = vmax.f32 %v898, 0.0
        %v1072 = vmax.f32 %v903, 0.0
        %v1073 = vmax.f32 %v908, 0.0
        %v1074 = vmax.f32 %v913, 0.0
        %v1075 = vmax.f32 %v918, 0.0
        %v1076 = vmax.f32 %v923, 0.0
        %v1077 = vmax.f32 %v928, 0.0
        %v1078 = vmax.f32 %v933, 0.0
        %v1079 = vmax.f32 %v938, 0.0
        %v1080 = vmax.f32 %v943, 0.0
        %v1081 = vmax.f32 %v948, 0.0
        %v1082 = vmax.f32 %v953, 0.0
        %v1083 = vmax.f32 %v958, 0.0
        %v1084 = vmax.f32 %v963, 0.0
        %v1085 = vmax.f32 %v968, 0.0
        %v1086 = vmax.f32 %v973, 0.0
        %v1087 = vmax.f32 %v978, 0.0
        %v1088 = vmax.f32 %v983, 0.0
        %v1089 = vmax.f32 %v988, 0.0
        %v1090 = vmax.f32 %v993, 0.0
        %v1091 = vmax.f32 %v998, 0.0
        %v1092 = vmax.f32 %v1003, 0.0
        %v1093 = vmax.f32 %v1008, 0.0
        %v1094 = vmax.f32 %v1013, 0.0
        %v1095 = vmax.f32 %v1018, 0.0
        %v1096 = vmax.f32 %v1023, 0.0
        %v1097 = vmax.f32 %v1028, 0.0
        %v1098 = vmax.f32 %v1033, 0.0
        %v1099 = vld [vmem:[%s3] sm:$0xff]
        %v1100 = vld [vmem:[%s3 + $0x8] sm:$0xff]
        %v1101 = vld [vmem:[%s3 + $0x10] sm:$0xff]
        %v1102 = vld [vmem:[%s3 + $0x18] sm:$0xff]
        %v1103 = vld [vmem:[%s3 + $0x20] sm:$0xff]
        %v1104 = vld [vmem:[%s3 + $0x28] sm:$0xff]
        %v1105 = vld [vmem:[%s3 + $0x30] sm:$0xff]
        %v1106 = vld [vmem:[%s3 + $0x38] sm:$0xff]
        %v1107 = vld [vmem:[%s3 + $0x40] sm:$0xff]
        %v1108 = vld [vmem:[%s3 + $0x48] sm:$0xff]
        %v1109 = vld [vmem:[%s3 + $0x50] sm:$0xff]
        %v1110 = vld [vmem:[%s3 + $0x58] sm:$0xff]
        %v1111 = vld [vmem:[%s3 + $0x60] sm:$0xff]
        %v1112 = vld [vmem:[%s3 + $0x68] sm:$0xff]
        %v1113 = vld [vmem:[%s3 + $0x70] sm:$0xff]
        %v1114 = vld [vmem:[%s3 + $0x78] sm:$0xff]
        %v1115 = vld [vmem:[%s4] sm:$0x1]
        %v1117 = vlaneseq
        %v1118 = vshrl.u32 %v1117, 7
        %v1119 = vsub.s32 0, %v1118
        %v1120 = vrot.slane %v1115, %v1119
        %1122 = vmatprep.subr.mxu0 0.0
        %1123 = vmatpush1.msra.mxu0 %v1114
        %1124 = vmatprep.subr.mxu0 0.0
        %1125 = vmatpush1.msra.mxu0 %v1113
        %1126 = vmatprep.subr.mxu0 0.0
        %1127 = vmatpush1.msra.mxu0 %v1112
        %1128 = vmatprep.subr.mxu0 0.0
        %1129 = vmatpush1.msra.mxu0 %v1111
        %1130 = vmatprep.subr.mxu0 0.0
        %1131 = vmatpush1.msra.mxu0 %v1110
        %1132 = vmatprep.subr.mxu0 0.0
        %1133 = vmatpush1.msra.mxu0 %v1109
        %1134 = vmatprep.subr.mxu0 0.0
        %1135 = vmatpush1.msra.mxu0 %v1108
        %1136 = vmatprep.subr.mxu0 0.0
        %1137 = vmatpush1.msra.mxu0 %v1107
        %1138 = vmatprep.subr.mxu0 0.0
        %1139 = vmatpush1.msra.mxu0 %v1106
        %1140 = vmatprep.subr.mxu0 0.0
        %1141 = vmatpush1.msra.mxu0 %v1105
        %1142 = vmatprep.subr.mxu0 0.0
        %1143 = vmatpush1.msra.mxu0 %v1104
        %1144 = vmatprep.subr.mxu0 0.0
        %1145 = vmatpush1.msra.mxu0 %v1103
        %1146 = vmatprep.subr.mxu0 0.0
        %1147 = vmatpush1.msra.mxu0 %v1102
        %1148 = vmatprep.subr.mxu0 0.0
        %1149 = vmatpush1.msra.mxu0 %v1101
        %1150 = vmatprep.subr.mxu0 0.0
        %1151 = vmatpush1.msra.mxu0 %v1100
        %1152 = vmatprep.subr.mxu0 0.0
        %1153 = vmatpush1.msra.mxu0 %v1099
        %1154 = vmatprep.subr.mxu0 0.0
        %1155 = vmatpush2.msra.mxu0 0.0
        %1156 = vmatprep.subr.mxu0 0.0
        %1157 = vmatpush2.msra.mxu0 0.0
        %1158 = vmatprep.subr.mxu0 0.0
        %1159 = vmatpush2.msra.mxu0 0.0
        %1160 = vmatprep.subr.mxu0 0.0
        %1161 = vmatpush2.msra.mxu0 0.0
        %1162 = vmatprep.subr.mxu0 0.0
        %1163 = vmatpush2.msra.mxu0 0.0
        %1164 = vmatprep.subr.mxu0 0.0
        %1165 = vmatpush2.msra.mxu0 0.0
        %1166 = vmatprep.subr.mxu0 0.0
        %1167 = vmatpush2.msra.mxu0 0.0
        %1168 = vmatprep.subr.mxu0 0.0
        %1169 = vmatpush2.msra.mxu0 0.0
        %1170 = vmatprep.subr.mxu0 0.0
        %1171 = vmatpush2.msra.mxu0 0.0
        %1172 = vmatprep.subr.mxu0 0.0
        %1173 = vmatpush2.msra.mxu0 0.0
        %1174 = vmatprep.subr.mxu0 0.0
        %1175 = vmatpush2.msra.mxu0 0.0
        %1176 = vmatprep.subr.mxu0 0.0
        %1177 = vmatpush2.msra.mxu0 0.0
        %1178 = vmatprep.subr.mxu0 0.0
        %1179 = vmatpush2.msra.mxu0 0.0
        %1180 = vmatprep.subr.mxu0 0.0
        %1181 = vmatpush2.msra.mxu0 0.0
        %1182 = vmatprep.subr.mxu0 0.0
        %1183 = vmatpush2.msra.mxu0 0.0
        %1184 = vmatprep.subr.mxu0 0.0
        %1185 = vmatpush2.msra.mxu0 0.0
        %1186 = vmatprep.mubr.f32.mxu0 0.0
        %1187 = vmatmul.mubr.f32.gmra.mxu0 %v1036
        %v1188 = vpop.f32.mrf.mxu0
        %v1189 = vadd.f32 %v1120, %v1188
        %v1190 = vpop.f32.mrf.mxu0
        %1191 = vmatprep.mubr.f32.mxu0 0.0
        %1192 = vmatmul.mubr.f32.gmra.mxu0 %v1037
        %v1193 = vpop.f32.mrf.mxu0
        %v1194 = vadd.f32 %v1120, %v1193
        %v1195 = vpop.f32.mrf.mxu0
        %1196 = vmatprep.mubr.f32.mxu0 0.0
        %1197 = vmatmul.mubr.f32.gmra.mxu0 %v1038
        %v1198 = vpop.f32.mrf.mxu0
        %v1199 = vadd.f32 %v1120, %v1198
        %v1200 = vpop.f32.mrf.mxu0
        %1201 = vmatprep.mubr.f32.mxu0 0.0
        %1202 = vmatmul.mubr.f32.gmra.mxu0 %v1039
        %v1203 = vpop.f32.mrf.mxu0
        %v1204 = vadd.f32 %v1120, %v1203
        %v1205 = vpop.f32.mrf.mxu0
        %1206 = vmatprep.mubr.f32.mxu0 0.0
        %1207 = vmatmul.mubr.f32.gmra.mxu0 %v1040
        %v1208 = vpop.f32.mrf.mxu0
        %v1209 = vadd.f32 %v1120, %v1208
        %v1210 = vpop.f32.mrf.mxu0
        %1211 = vmatprep.mubr.f32.mxu0 0.0
        %1212 = vmatmul.mubr.f32.gmra.mxu0 %v1041
        %v1213 = vpop.f32.mrf.mxu0
        %v1214 = vadd.f32 %v1120, %v1213
        %v1215 = vpop.f32.mrf.mxu0
        %1216 = vmatprep.mubr.f32.mxu0 0.0
        %1217 = vmatmul.mubr.f32.gmra.mxu0 %v1042
        %v1218 = vpop.f32.mrf.mxu0
        %v1219 = vadd.f32 %v1120, %v1218
        %v1220 = vpop.f32.mrf.mxu0
        %1221 = vmatprep.mubr.f32.mxu0 0.0
        %1222 = vmatmul.mubr.f32.gmra.mxu0 %v1043
        %v1223 = vpop.f32.mrf.mxu0
        %v1224 = vadd.f32 %v1120, %v1223
        %v1225 = vpop.f32.mrf.mxu0
        %1226 = vmatprep.mubr.f32.mxu0 0.0
        %1227 = vmatmul.mubr.f32.gmra.mxu0 %v1044
        %v1228 = vpop.f32.mrf.mxu0
        %v1229 = vadd.f32 %v1120, %v1228
        %v1230 = vpop.f32.mrf.mxu0
        %1231 = vmatprep.mubr.f32.mxu0 0.0
        %1232 = vmatmul.mubr.f32.gmra.mxu0 %v1045
        %v1233 = vpop.f32.mrf.mxu0
        %v1234 = vadd.f32 %v1120, %v1233
        %v1235 = vpop.f32.mrf.mxu0
        %1236 = vmatprep.mubr.f32.mxu0 0.0
        %1237 = vmatmul.mubr.f32.gmra.mxu0 %v1046
        %v1238 = vpop.f32.mrf.mxu0
        %v1239 = vadd.f32 %v1120, %v1238
        %v1240 = vpop.f32.mrf.mxu0
        %1241 = vmatprep.mubr.f32.mxu0 0.0
        %1242 = vmatmul.mubr.f32.gmra.mxu0 %v1047
        %v1243 = vpop.f32.mrf.mxu0
        %v1244 = vadd.f32 %v1120, %v1243
        %v1245 = vpop.f32.mrf.mxu0
        %1246 = vmatprep.mubr.f32.mxu0 0.0
        %1247 = vmatmul.mubr.f32.gmra.mxu0 %v1048
        %v1248 = vpop.f32.mrf.mxu0
        %v1249 = vadd.f32 %v1120, %v1248
        %v1250 = vpop.f32.mrf.mxu0
        %1251 = vmatprep.mubr.f32.mxu0 0.0
        %1252 = vmatmul.mubr.f32.gmra.mxu0 %v1049
        %v1253 = vpop.f32.mrf.mxu0
        %v1254 = vadd.f32 %v1120, %v1253
        %v1255 = vpop.f32.mrf.mxu0
        %1256 = vmatprep.mubr.f32.mxu0 0.0
        %1257 = vmatmul.mubr.f32.gmra.mxu0 %v1050
        %v1258 = vpop.f32.mrf.mxu0
        %v1259 = vadd.f32 %v1120, %v1258
        %v1260 = vpop.f32.mrf.mxu0
        %1261 = vmatprep.mubr.f32.mxu0 0.0
        %1262 = vmatmul.mubr.f32.gmra.mxu0 %v1051
        %v1263 = vpop.f32.mrf.mxu0
        %v1264 = vadd.f32 %v1120, %v1263
        %v1265 = vpop.f32.mrf.mxu0
        %1266 = vmatprep.mubr.f32.mxu0 0.0
        %1267 = vmatmul.mubr.f32.gmra.mxu0 %v1052
        %v1268 = vpop.f32.mrf.mxu0
        %v1269 = vadd.f32 %v1120, %v1268
        %v1270 = vpop.f32.mrf.mxu0
        %1271 = vmatprep.mubr.f32.mxu0 0.0
        %1272 = vmatmul.mubr.f32.gmra.mxu0 %v1053
        %v1273 = vpop.f32.mrf.mxu0
        %v1274 = vadd.f32 %v1120, %v1273
        %v1275 = vpop.f32.mrf.mxu0
        %1276 = vmatprep.mubr.f32.mxu0 0.0
        %1277 = vmatmul.mubr.f32.gmra.mxu0 %v1054
        %v1278 = vpop.f32.mrf.mxu0
        %v1279 = vadd.f32 %v1120, %v1278
        %v1280 = vpop.f32.mrf.mxu0
        %1281 = vmatprep.mubr.f32.mxu0 0.0
        %1282 = vmatmul.mubr.f32.gmra.mxu0 %v1055
        %v1283 = vpop.f32.mrf.mxu0
        %v1284 = vadd.f32 %v1120, %v1283
        %v1285 = vpop.f32.mrf.mxu0
        %1286 = vmatprep.mubr.f32.mxu0 0.0
        %1287 = vmatmul.mubr.f32.gmra.mxu0 %v1056
        %v1288 = vpop.f32.mrf.mxu0
        %v1289 = vadd.f32 %v1120, %v1288
        %v1290 = vpop.f32.mrf.mxu0
        %1291 = vmatprep.mubr.f32.mxu0 0.0
        %1292 = vmatmul.mubr.f32.gmra.mxu0 %v1057
        %v1293 = vpop.f32.mrf.mxu0
        %v1294 = vadd.f32 %v1120, %v1293
        %v1295 = vpop.f32.mrf.mxu0
        %1296 = vmatprep.mubr.f32.mxu0 0.0
        %1297 = vmatmul.mubr.f32.gmra.mxu0 %v1058
        %v1298 = vpop.f32.mrf.mxu0
        %v1299 = vadd.f32 %v1120, %v1298
        %v1300 = vpop.f32.mrf.mxu0
        %1301 = vmatprep.mubr.f32.mxu0 0.0
        %1302 = vmatmul.mubr.f32.gmra.mxu0 %v1059
        %v1303 = vpop.f32.mrf.mxu0
        %v1304 = vadd.f32 %v1120, %v1303
        %v1305 = vpop.f32.mrf.mxu0
        %1306 = vmatprep.mubr.f32.mxu0 0.0
        %1307 = vmatmul.mubr.f32.gmra.mxu0 %v1060
        %v1308 = vpop.f32.mrf.mxu0
        %v1309 = vadd.f32 %v1120, %v1308
        %v1310 = vpop.f32.mrf.mxu0
        %1311 = vmatprep.mubr.f32.mxu0 0.0
        %1312 = vmatmul.mubr.f32.gmra.mxu0 %v1061
        %v1313 = vpop.f32.mrf.mxu0
        %v1314 = vadd.f32 %v1120, %v1313
        %v1315 = vpop.f32.mrf.mxu0
        %1316 = vmatprep.mubr.f32.mxu0 0.0
        %1317 = vmatmul.mubr.f32.gmra.mxu0 %v1062
        %v1318 = vpop.f32.mrf.mxu0
        %v1319 = vadd.f32 %v1120, %v1318
        %v1320 = vpop.f32.mrf.mxu0
        %1321 = vmatprep.mubr.f32.mxu0 0.0
        %1322 = vmatmul.mubr.f32.gmra.mxu0 %v1063
        %v1323 = vpop.f32.mrf.mxu0
        %v1324 = vadd.f32 %v1120, %v1323
        %v1325 = vpop.f32.mrf.mxu0
        %1326 = vmatprep.mubr.f32.mxu0 0.0
        %1327 = vmatmul.mubr.f32.gmra.mxu0 %v1064
        %v1328 = vpop.f32.mrf.mxu0
        %v1329 = vadd.f32 %v1120, %v1328
        %v1330 = vpop.f32.mrf.mxu0
        %1331 = vmatprep.mubr.f32.mxu0 0.0
        %1332 = vmatmul.mubr.f32.gmra.mxu0 %v1065
        %v1333 = vpop.f32.mrf.mxu0
        %v1334 = vadd.f32 %v1120, %v1333
        %v1335 = vpop.f32.mrf.mxu0
        %1336 = vmatprep.mubr.f32.mxu0 0.0
        %1337 = vmatmul.mubr.f32.gmra.mxu0 %v1066
        %v1338 = vpop.f32.mrf.mxu0
        %v1339 = vadd.f32 %v1120, %v1338
        %v1340 = vpop.f32.mrf.mxu0
        %1341 = vmatprep.mubr.f32.mxu0 0.0
        %1342 = vmatmul.mubr.f32.gmra.mxu0 %v1067
        %v1343 = vpop.f32.mrf.mxu0
        %v1344 = vadd.f32 %v1120, %v1343
        %v1345 = vpop.f32.mrf.mxu0
        %1346 = vmatprep.mubr.f32.mxu0 0.0
        %1347 = vmatmul.mubr.f32.gmra.mxu0 %v1068
        %v1348 = vpop.f32.mrf.mxu0
        %v1349 = vadd.f32 %v1120, %v1348
        %v1350 = vpop.f32.mrf.mxu0
        %1351 = vmatprep.mubr.f32.mxu0 0.0
        %1352 = vmatmul.mubr.f32.gmra.mxu0 %v1069
        %v1353 = vpop.f32.mrf.mxu0
        %v1354 = vadd.f32 %v1120, %v1353
        %v1355 = vpop.f32.mrf.mxu0
        %1356 = vmatprep.mubr.f32.mxu0 0.0
        %1357 = vmatmul.mubr.f32.gmra.mxu0 %v1070
        %v1358 = vpop.f32.mrf.mxu0
        %v1359 = vadd.f32 %v1120, %v1358
        %v1360 = vpop.f32.mrf.mxu0
        %1361 = vmatprep.mubr.f32.mxu0 0.0
        %1362 = vmatmul.mubr.f32.gmra.mxu0 %v1071
        %v1363 = vpop.f32.mrf.mxu0
        %v1364 = vadd.f32 %v1120, %v1363
        %v1365 = vpop.f32.mrf.mxu0
        %1366 = vmatprep.mubr.f32.mxu0 0.0
        %1367 = vmatmul.mubr.f32.gmra.mxu0 %v1072
        %v1368 = vpop.f32.mrf.mxu0
        %v1369 = vadd.f32 %v1120, %v1368
        %v1370 = vpop.f32.mrf.mxu0
        %1371 = vmatprep.mubr.f32.mxu0 0.0
        %1372 = vmatmul.mubr.f32.gmra.mxu0 %v1073
        %v1373 = vpop.f32.mrf.mxu0
        %v1374 = vadd.f32 %v1120, %v1373
        %v1375 = vpop.f32.mrf.mxu0
        %1376 = vmatprep.mubr.f32.mxu0 0.0
        %1377 = vmatmul.mubr.f32.gmra.mxu0 %v1074
        %v1378 = vpop.f32.mrf.mxu0
        %v1379 = vadd.f32 %v1120, %v1378
        %v1380 = vpop.f32.mrf.mxu0
        %1381 = vmatprep.mubr.f32.mxu0 0.0
        %1382 = vmatmul.mubr.f32.gmra.mxu0 %v1075
        %v1383 = vpop.f32.mrf.mxu0
        %v1384 = vadd.f32 %v1120, %v1383
        %v1385 = vpop.f32.mrf.mxu0
        %1386 = vmatprep.mubr.f32.mxu0 0.0
        %1387 = vmatmul.mubr.f32.gmra.mxu0 %v1076
        %v1388 = vpop.f32.mrf.mxu0
        %v1389 = vadd.f32 %v1120, %v1388
        %v1390 = vpop.f32.mrf.mxu0
        %1391 = vmatprep.mubr.f32.mxu0 0.0
        %1392 = vmatmul.mubr.f32.gmra.mxu0 %v1077
        %v1393 = vpop.f32.mrf.mxu0
        %v1394 = vadd.f32 %v1120, %v1393
        %v1395 = vpop.f32.mrf.mxu0
        %1396 = vmatprep.mubr.f32.mxu0 0.0
        %1397 = vmatmul.mubr.f32.gmra.mxu0 %v1078
        %v1398 = vpop.f32.mrf.mxu0
        %v1399 = vadd.f32 %v1120, %v1398
        %v1400 = vpop.f32.mrf.mxu0
        %1401 = vmatprep.mubr.f32.mxu0 0.0
        %1402 = vmatmul.mubr.f32.gmra.mxu0 %v1079
        %v1403 = vpop.f32.mrf.mxu0
        %v1404 = vadd.f32 %v1120, %v1403
        %v1405 = vpop.f32.mrf.mxu0
        %1406 = vmatprep.mubr.f32.mxu0 0.0
        %1407 = vmatmul.mubr.f32.gmra.mxu0 %v1080
        %v1408 = vpop.f32.mrf.mxu0
        %v1409 = vadd.f32 %v1120, %v1408
        %v1410 = vpop.f32.mrf.mxu0
        %1411 = vmatprep.mubr.f32.mxu0 0.0
        %1412 = vmatmul.mubr.f32.gmra.mxu0 %v1081
        %v1413 = vpop.f32.mrf.mxu0
        %v1414 = vadd.f32 %v1120, %v1413
        %v1415 = vpop.f32.mrf.mxu0
        %1416 = vmatprep.mubr.f32.mxu0 0.0
        %1417 = vmatmul.mubr.f32.gmra.mxu0 %v1082
        %v1418 = vpop.f32.mrf.mxu0
        %v1419 = vadd.f32 %v1120, %v1418
        %v1420 = vpop.f32.mrf.mxu0
        %1421 = vmatprep.mubr.f32.mxu0 0.0
        %1422 = vmatmul.mubr.f32.gmra.mxu0 %v1083
        %v1423 = vpop.f32.mrf.mxu0
        %v1424 = vadd.f32 %v1120, %v1423
        %v1425 = vpop.f32.mrf.mxu0
        %1426 = vmatprep.mubr.f32.mxu0 0.0
        %1427 = vmatmul.mubr.f32.gmra.mxu0 %v1084
        %v1428 = vpop.f32.mrf.mxu0
        %v1429 = vadd.f32 %v1120, %v1428
        %v1430 = vpop.f32.mrf.mxu0
        %1431 = vmatprep.mubr.f32.mxu0 0.0
        %1432 = vmatmul.mubr.f32.gmra.mxu0 %v1085
        %v1433 = vpop.f32.mrf.mxu0
        %v1434 = vadd.f32 %v1120, %v1433
        %v1435 = vpop.f32.mrf.mxu0
        %1436 = vmatprep.mubr.f32.mxu0 0.0
        %1437 = vmatmul.mubr.f32.gmra.mxu0 %v1086
        %v1438 = vpop.f32.mrf.mxu0
        %v1439 = vadd.f32 %v1120, %v1438
        %v1440 = vpop.f32.mrf.mxu0
        %1441 = vmatprep.mubr.f32.mxu0 0.0
        %1442 = vmatmul.mubr.f32.gmra.mxu0 %v1087
        %v1443 = vpop.f32.mrf.mxu0
        %v1444 = vadd.f32 %v1120, %v1443
        %v1445 = vpop.f32.mrf.mxu0
        %1446 = vmatprep.mubr.f32.mxu0 0.0
        %1447 = vmatmul.mubr.f32.gmra.mxu0 %v1088
        %v1448 = vpop.f32.mrf.mxu0
        %v1449 = vadd.f32 %v1120, %v1448
        %v1450 = vpop.f32.mrf.mxu0
        %1451 = vmatprep.mubr.f32.mxu0 0.0
        %1452 = vmatmul.mubr.f32.gmra.mxu0 %v1089
        %v1453 = vpop.f32.mrf.mxu0
        %v1454 = vadd.f32 %v1120, %v1453
        %v1455 = vpop.f32.mrf.mxu0
        %1456 = vmatprep.mubr.f32.mxu0 0.0
        %1457 = vmatmul.mubr.f32.gmra.mxu0 %v1090
        %v1458 = vpop.f32.mrf.mxu0
        %v1459 = vadd.f32 %v1120, %v1458
        %v1460 = vpop.f32.mrf.mxu0
        %1461 = vmatprep.mubr.f32.mxu0 0.0
        %1462 = vmatmul.mubr.f32.gmra.mxu0 %v1091
        %v1463 = vpop.f32.mrf.mxu0
        %v1464 = vadd.f32 %v1120, %v1463
        %v1465 = vpop.f32.mrf.mxu0
        %1466 = vmatprep.mubr.f32.mxu0 0.0
        %1467 = vmatmul.mubr.f32.gmra.mxu0 %v1092
        %v1468 = vpop.f32.mrf.mxu0
        %v1469 = vadd.f32 %v1120, %v1468
        %v1470 = vpop.f32.mrf.mxu0
        %1471 = vmatprep.mubr.f32.mxu0 0.0
        %1472 = vmatmul.mubr.f32.gmra.mxu0 %v1093
        %v1473 = vpop.f32.mrf.mxu0
        %v1474 = vadd.f32 %v1120, %v1473
        %v1475 = vpop.f32.mrf.mxu0
        %1476 = vmatprep.mubr.f32.mxu0 0.0
        %1477 = vmatmul.mubr.f32.gmra.mxu0 %v1094
        %v1478 = vpop.f32.mrf.mxu0
        %v1479 = vadd.f32 %v1120, %v1478
        %v1480 = vpop.f32.mrf.mxu0
        %1481 = vmatprep.mubr.f32.mxu0 0.0
        %1482 = vmatmul.mubr.f32.gmra.mxu0 %v1095
        %v1483 = vpop.f32.mrf.mxu0
        %v1484 = vadd.f32 %v1120, %v1483
        %v1485 = vpop.f32.mrf.mxu0
        %1486 = vmatprep.mubr.f32.mxu0 0.0
        %1487 = vmatmul.mubr.f32.gmra.mxu0 %v1096
        %v1488 = vpop.f32.mrf.mxu0
        %v1489 = vadd.f32 %v1120, %v1488
        %v1490 = vpop.f32.mrf.mxu0
        %1491 = vmatprep.mubr.f32.mxu0 0.0
        %1492 = vmatmul.mubr.f32.gmra.mxu0 %v1097
        %v1493 = vpop.f32.mrf.mxu0
        %v1494 = vadd.f32 %v1120, %v1493
        %v1495 = vpop.f32.mrf.mxu0
        %1496 = vmatprep.mubr.f32.mxu0 0.0
        %1497 = vmatmul.mubr.f32.gmra.mxu0 %v1098
        %v1498 = vpop.f32.mrf.mxu0
        %v1499 = vadd.f32 %v1120, %v1498
        %v1500 = vpop.f32.mrf.mxu0
        %1501 = vdwg.mxu0
        %v1502 = vmax.f32 %v1189, 0.0
        %v1503 = vmax.f32 %v1194, 0.0
        %v1504 = vmax.f32 %v1199, 0.0
        %v1505 = vmax.f32 %v1204, 0.0
        %v1506 = vmax.f32 %v1209, 0.0
        %v1507 = vmax.f32 %v1214, 0.0
        %v1508 = vmax.f32 %v1219, 0.0
        %v1509 = vmax.f32 %v1224, 0.0
        %v1510 = vmax.f32 %v1229, 0.0
        %v1511 = vmax.f32 %v1234, 0.0
        %v1512 = vmax.f32 %v1239, 0.0
        %v1513 = vmax.f32 %v1244, 0.0
        %v1514 = vmax.f32 %v1249, 0.0
        %v1515 = vmax.f32 %v1254, 0.0
        %v1516 = vmax.f32 %v1259, 0.0
        %v1517 = vmax.f32 %v1264, 0.0
        %v1518 = vmax.f32 %v1269, 0.0
        %v1519 = vmax.f32 %v1274, 0.0
        %v1520 = vmax.f32 %v1279, 0.0
        %v1521 = vmax.f32 %v1284, 0.0
        %v1522 = vmax.f32 %v1289, 0.0
        %v1523 = vmax.f32 %v1294, 0.0
        %v1524 = vmax.f32 %v1299, 0.0
        %v1525 = vmax.f32 %v1304, 0.0
        %v1526 = vmax.f32 %v1309, 0.0
        %v1527 = vmax.f32 %v1314, 0.0
        %v1528 = vmax.f32 %v1319, 0.0
        %v1529 = vmax.f32 %v1324, 0.0
        %v1530 = vmax.f32 %v1329, 0.0
        %v1531 = vmax.f32 %v1334, 0.0
        %v1532 = vmax.f32 %v1339, 0.0
        %v1533 = vmax.f32 %v1344, 0.0
        %v1534 = vmax.f32 %v1349, 0.0
        %v1535 = vmax.f32 %v1354, 0.0
        %v1536 = vmax.f32 %v1359, 0.0
        %v1537 = vmax.f32 %v1364, 0.0
        %v1538 = vmax.f32 %v1369, 0.0
        %v1539 = vmax.f32 %v1374, 0.0
        %v1540 = vmax.f32 %v1379, 0.0
        %v1541 = vmax.f32 %v1384, 0.0
        %v1542 = vmax.f32 %v1389, 0.0
        %v1543 = vmax.f32 %v1394, 0.0
        %v1544 = vmax.f32 %v1399, 0.0
        %v1545 = vmax.f32 %v1404, 0.0
        %v1546 = vmax.f32 %v1409, 0.0
        %v1547 = vmax.f32 %v1414, 0.0
        %v1548 = vmax.f32 %v1419, 0.0
        %v1549 = vmax.f32 %v1424, 0.0
        %v1550 = vmax.f32 %v1429, 0.0
        %v1551 = vmax.f32 %v1434, 0.0
        %v1552 = vmax.f32 %v1439, 0.0
        %v1553 = vmax.f32 %v1444, 0.0
        %v1554 = vmax.f32 %v1449, 0.0
        %v1555 = vmax.f32 %v1454, 0.0
        %v1556 = vmax.f32 %v1459, 0.0
        %v1557 = vmax.f32 %v1464, 0.0
        %v1558 = vmax.f32 %v1469, 0.0
        %v1559 = vmax.f32 %v1474, 0.0
        %v1560 = vmax.f32 %v1479, 0.0
        %v1561 = vmax.f32 %v1484, 0.0
        %v1562 = vmax.f32 %v1489, 0.0
        %v1563 = vmax.f32 %v1494, 0.0
        %v1564 = vmax.f32 %v1499, 0.0
        %v1565 = vld [vmem:[%s5] sm:$0x1]
        %v1567 = vlaneseq
        %v1568 = vshrl.u32 %v1567, 7
        %v1569 = vsub.s32 0, %v1568
        %v1570 = vrot.slane %v1565, %v1569
        %v1572 = vmul.f32 %v1502, %v1570
        %v1573 = vmul.f32 %v1503, %v1570
        %v1574 = vmul.f32 %v1504, %v1570
        %v1575 = vmul.f32 %v1505, %v1570
        %v1576 = vmul.f32 %v1506, %v1570
        %v1577 = vmul.f32 %v1507, %v1570
        %v1578 = vmul.f32 %v1508, %v1570
        %v1579 = vmul.f32 %v1509, %v1570
        %v1580 = vmul.f32 %v1510, %v1570
        %v1581 = vmul.f32 %v1511, %v1570
        %v1582 = vmul.f32 %v1512, %v1570
        %v1583 = vmul.f32 %v1513, %v1570
        %v1584 = vmul.f32 %v1514, %v1570
        %v1585 = vmul.f32 %v1515, %v1570
        %v1586 = vmul.f32 %v1516, %v1570
        %v1587 = vmul.f32 %v1517, %v1570
        %v1588 = vmul.f32 %v1518, %v1570
        %v1589 = vmul.f32 %v1519, %v1570
        %v1590 = vmul.f32 %v1520, %v1570
        %v1591 = vmul.f32 %v1521, %v1570
        %v1592 = vmul.f32 %v1522, %v1570
        %v1593 = vmul.f32 %v1523, %v1570
        %v1594 = vmul.f32 %v1524, %v1570
        %v1595 = vmul.f32 %v1525, %v1570
        %v1596 = vmul.f32 %v1526, %v1570
        %v1597 = vmul.f32 %v1527, %v1570
        %v1598 = vmul.f32 %v1528, %v1570
        %v1599 = vmul.f32 %v1529, %v1570
        %v1600 = vmul.f32 %v1530, %v1570
        %v1601 = vmul.f32 %v1531, %v1570
        %v1602 = vmul.f32 %v1532, %v1570
        %v1603 = vmul.f32 %v1533, %v1570
        %v1604 = vmul.f32 %v1534, %v1570
        %v1605 = vmul.f32 %v1535, %v1570
        %v1606 = vmul.f32 %v1536, %v1570
        %v1607 = vmul.f32 %v1537, %v1570
        %v1608 = vmul.f32 %v1538, %v1570
        %v1609 = vmul.f32 %v1539, %v1570
        %v1610 = vmul.f32 %v1540, %v1570
        %v1611 = vmul.f32 %v1541, %v1570
        %v1612 = vmul.f32 %v1542, %v1570
        %v1613 = vmul.f32 %v1543, %v1570
        %v1614 = vmul.f32 %v1544, %v1570
        %v1615 = vmul.f32 %v1545, %v1570
        %v1616 = vmul.f32 %v1546, %v1570
        %v1617 = vmul.f32 %v1547, %v1570
        %v1618 = vmul.f32 %v1548, %v1570
        %v1619 = vmul.f32 %v1549, %v1570
        %v1620 = vmul.f32 %v1550, %v1570
        %v1621 = vmul.f32 %v1551, %v1570
        %v1622 = vmul.f32 %v1552, %v1570
        %v1623 = vmul.f32 %v1553, %v1570
        %v1624 = vmul.f32 %v1554, %v1570
        %v1625 = vmul.f32 %v1555, %v1570
        %v1626 = vmul.f32 %v1556, %v1570
        %v1627 = vmul.f32 %v1557, %v1570
        %v1628 = vmul.f32 %v1558, %v1570
        %v1629 = vmul.f32 %v1559, %v1570
        %v1630 = vmul.f32 %v1560, %v1570
        %v1631 = vmul.f32 %v1561, %v1570
        %v1632 = vmul.f32 %v1562, %v1570
        %v1633 = vmul.f32 %v1563, %v1570
        %v1634 = vmul.f32 %v1564, %v1570
        %vm1635 = vcmask 523264
        %v1636 = vsel %vm1635, %v1572, 0.0
        %1637 = vadd.xlane.f32.xlu0 %v1636
        %v1638 = vpop.xlane.xlu0 %1637
        %v1639 = vsel %vm1635, %v1573, 0.0
        %1640 = vadd.xlane.f32.xlu0 %v1639
        %v1641 = vpop.xlane.xlu0 %1640
        %v1642 = vsel %vm1635, %v1574, 0.0
        %1643 = vadd.xlane.f32.xlu0 %v1642
        %v1644 = vpop.xlane.xlu0 %1643
        %v1645 = vsel %vm1635, %v1575, 0.0
        %1646 = vadd.xlane.f32.xlu0 %v1645
        %v1647 = vpop.xlane.xlu0 %1646
        %v1648 = vsel %vm1635, %v1576, 0.0
        %1649 = vadd.xlane.f32.xlu0 %v1648
        %v1650 = vpop.xlane.xlu0 %1649
        %v1651 = vsel %vm1635, %v1577, 0.0
        %1652 = vadd.xlane.f32.xlu0 %v1651
        %v1653 = vpop.xlane.xlu0 %1652
        %v1654 = vsel %vm1635, %v1578, 0.0
        %1655 = vadd.xlane.f32.xlu0 %v1654
        %v1656 = vpop.xlane.xlu0 %1655
        %v1657 = vsel %vm1635, %v1579, 0.0
        %1658 = vadd.xlane.f32.xlu0 %v1657
        %v1659 = vpop.xlane.xlu0 %1658
        %v1660 = vsel %vm1635, %v1580, 0.0
        %1661 = vadd.xlane.f32.xlu0 %v1660
        %v1662 = vpop.xlane.xlu0 %1661
        %v1663 = vsel %vm1635, %v1581, 0.0
        %1664 = vadd.xlane.f32.xlu0 %v1663
        %v1665 = vpop.xlane.xlu0 %1664
        %v1666 = vsel %vm1635, %v1582, 0.0
        %1667 = vadd.xlane.f32.xlu0 %v1666
        %v1668 = vpop.xlane.xlu0 %1667
        %v1669 = vsel %vm1635, %v1583, 0.0
        %1670 = vadd.xlane.f32.xlu0 %v1669
        %v1671 = vpop.xlane.xlu0 %1670
        %v1672 = vsel %vm1635, %v1584, 0.0
        %1673 = vadd.xlane.f32.xlu0 %v1672
        %v1674 = vpop.xlane.xlu0 %1673
        %v1675 = vsel %vm1635, %v1585, 0.0
        %1676 = vadd.xlane.f32.xlu0 %v1675
        %v1677 = vpop.xlane.xlu0 %1676
        %v1678 = vsel %vm1635, %v1586, 0.0
        %1679 = vadd.xlane.f32.xlu0 %v1678
        %v1680 = vpop.xlane.xlu0 %1679
        %v1681 = vsel %vm1635, %v1587, 0.0
        %1682 = vadd.xlane.f32.xlu0 %v1681
        %v1683 = vpop.xlane.xlu0 %1682
        %v1684 = vsel %vm1635, %v1588, 0.0
        %1685 = vadd.xlane.f32.xlu0 %v1684
        %v1686 = vpop.xlane.xlu0 %1685
        %v1687 = vsel %vm1635, %v1589, 0.0
        %1688 = vadd.xlane.f32.xlu0 %v1687
        %v1689 = vpop.xlane.xlu0 %1688
        %v1690 = vsel %vm1635, %v1590, 0.0
        %1691 = vadd.xlane.f32.xlu0 %v1690
        %v1692 = vpop.xlane.xlu0 %1691
        %v1693 = vsel %vm1635, %v1591, 0.0
        %1694 = vadd.xlane.f32.xlu0 %v1693
        %v1695 = vpop.xlane.xlu0 %1694
        %v1696 = vsel %vm1635, %v1592, 0.0
        %1697 = vadd.xlane.f32.xlu0 %v1696
        %v1698 = vpop.xlane.xlu0 %1697
        %v1699 = vsel %vm1635, %v1593, 0.0
        %1700 = vadd.xlane.f32.xlu0 %v1699
        %v1701 = vpop.xlane.xlu0 %1700
        %v1702 = vsel %vm1635, %v1594, 0.0
        %1703 = vadd.xlane.f32.xlu0 %v1702
        %v1704 = vpop.xlane.xlu0 %1703
        %v1705 = vsel %vm1635, %v1595, 0.0
        %1706 = vadd.xlane.f32.xlu0 %v1705
        %v1707 = vpop.xlane.xlu0 %1706
        %v1708 = vsel %vm1635, %v1596, 0.0
        %1709 = vadd.xlane.f32.xlu0 %v1708
        %v1710 = vpop.xlane.xlu0 %1709
        %v1711 = vsel %vm1635, %v1597, 0.0
        %1712 = vadd.xlane.f32.xlu0 %v1711
        %v1713 = vpop.xlane.xlu0 %1712
        %v1714 = vsel %vm1635, %v1598, 0.0
        %1715 = vadd.xlane.f32.xlu0 %v1714
        %v1716 = vpop.xlane.xlu0 %1715
        %v1717 = vsel %vm1635, %v1599, 0.0
        %1718 = vadd.xlane.f32.xlu0 %v1717
        %v1719 = vpop.xlane.xlu0 %1718
        %v1720 = vsel %vm1635, %v1600, 0.0
        %1721 = vadd.xlane.f32.xlu0 %v1720
        %v1722 = vpop.xlane.xlu0 %1721
        %v1723 = vsel %vm1635, %v1601, 0.0
        %1724 = vadd.xlane.f32.xlu0 %v1723
        %v1725 = vpop.xlane.xlu0 %1724
        %v1726 = vsel %vm1635, %v1602, 0.0
        %1727 = vadd.xlane.f32.xlu0 %v1726
        %v1728 = vpop.xlane.xlu0 %1727
        %v1729 = vsel %vm1635, %v1603, 0.0
        %1730 = vadd.xlane.f32.xlu0 %v1729
        %v1731 = vpop.xlane.xlu0 %1730
        %v1732 = vsel %vm1635, %v1604, 0.0
        %1733 = vadd.xlane.f32.xlu0 %v1732
        %v1734 = vpop.xlane.xlu0 %1733
        %v1735 = vsel %vm1635, %v1605, 0.0
        %1736 = vadd.xlane.f32.xlu0 %v1735
        %v1737 = vpop.xlane.xlu0 %1736
        %v1738 = vsel %vm1635, %v1606, 0.0
        %1739 = vadd.xlane.f32.xlu0 %v1738
        %v1740 = vpop.xlane.xlu0 %1739
        %v1741 = vsel %vm1635, %v1607, 0.0
        %1742 = vadd.xlane.f32.xlu0 %v1741
        %v1743 = vpop.xlane.xlu0 %1742
        %v1744 = vsel %vm1635, %v1608, 0.0
        %1745 = vadd.xlane.f32.xlu0 %v1744
        %v1746 = vpop.xlane.xlu0 %1745
        %v1747 = vsel %vm1635, %v1609, 0.0
        %1748 = vadd.xlane.f32.xlu0 %v1747
        %v1749 = vpop.xlane.xlu0 %1748
        %v1750 = vsel %vm1635, %v1610, 0.0
        %1751 = vadd.xlane.f32.xlu0 %v1750
        %v1752 = vpop.xlane.xlu0 %1751
        %v1753 = vsel %vm1635, %v1611, 0.0
        %1754 = vadd.xlane.f32.xlu0 %v1753
        %v1755 = vpop.xlane.xlu0 %1754
        %v1756 = vsel %vm1635, %v1612, 0.0
        %1757 = vadd.xlane.f32.xlu0 %v1756
        %v1758 = vpop.xlane.xlu0 %1757
        %v1759 = vsel %vm1635, %v1613, 0.0
        %1760 = vadd.xlane.f32.xlu0 %v1759
        %v1761 = vpop.xlane.xlu0 %1760
        %v1762 = vsel %vm1635, %v1614, 0.0
        %1763 = vadd.xlane.f32.xlu0 %v1762
        %v1764 = vpop.xlane.xlu0 %1763
        %v1765 = vsel %vm1635, %v1615, 0.0
        %1766 = vadd.xlane.f32.xlu0 %v1765
        %v1767 = vpop.xlane.xlu0 %1766
        %v1768 = vsel %vm1635, %v1616, 0.0
        %1769 = vadd.xlane.f32.xlu0 %v1768
        %v1770 = vpop.xlane.xlu0 %1769
        %v1771 = vsel %vm1635, %v1617, 0.0
        %1772 = vadd.xlane.f32.xlu0 %v1771
        %v1773 = vpop.xlane.xlu0 %1772
        %v1774 = vsel %vm1635, %v1618, 0.0
        %1775 = vadd.xlane.f32.xlu0 %v1774
        %v1776 = vpop.xlane.xlu0 %1775
        %v1777 = vsel %vm1635, %v1619, 0.0
        %1778 = vadd.xlane.f32.xlu0 %v1777
        %v1779 = vpop.xlane.xlu0 %1778
        %v1780 = vsel %vm1635, %v1620, 0.0
        %1781 = vadd.xlane.f32.xlu0 %v1780
        %v1782 = vpop.xlane.xlu0 %1781
        %v1783 = vsel %vm1635, %v1621, 0.0
        %1784 = vadd.xlane.f32.xlu0 %v1783
        %v1785 = vpop.xlane.xlu0 %1784
        %v1786 = vsel %vm1635, %v1622, 0.0
        %1787 = vadd.xlane.f32.xlu0 %v1786
        %v1788 = vpop.xlane.xlu0 %1787
        %v1789 = vsel %vm1635, %v1623, 0.0
        %1790 = vadd.xlane.f32.xlu0 %v1789
        %v1791 = vpop.xlane.xlu0 %1790
        %v1792 = vsel %vm1635, %v1624, 0.0
        %1793 = vadd.xlane.f32.xlu0 %v1792
        %v1794 = vpop.xlane.xlu0 %1793
        %v1795 = vsel %vm1635, %v1625, 0.0
        %1796 = vadd.xlane.f32.xlu0 %v1795
        %v1797 = vpop.xlane.xlu0 %1796
        %v1798 = vsel %vm1635, %v1626, 0.0
        %1799 = vadd.xlane.f32.xlu0 %v1798
        %v1800 = vpop.xlane.xlu0 %1799
        %v1801 = vsel %vm1635, %v1627, 0.0
        %1802 = vadd.xlane.f32.xlu0 %v1801
        %v1803 = vpop.xlane.xlu0 %1802
        %v1804 = vsel %vm1635, %v1628, 0.0
        %1805 = vadd.xlane.f32.xlu0 %v1804
        %v1806 = vpop.xlane.xlu0 %1805
        %v1807 = vsel %vm1635, %v1629, 0.0
        %1808 = vadd.xlane.f32.xlu0 %v1807
        %v1809 = vpop.xlane.xlu0 %1808
        %v1810 = vsel %vm1635, %v1630, 0.0
        %1811 = vadd.xlane.f32.xlu0 %v1810
        %v1812 = vpop.xlane.xlu0 %1811
        %v1813 = vsel %vm1635, %v1631, 0.0
        %1814 = vadd.xlane.f32.xlu0 %v1813
        %v1815 = vpop.xlane.xlu0 %1814
        %v1816 = vsel %vm1635, %v1632, 0.0
        %1817 = vadd.xlane.f32.xlu0 %v1816
        %v1818 = vpop.xlane.xlu0 %1817
        %v1819 = vsel %vm1635, %v1633, 0.0
        %1820 = vadd.xlane.f32.xlu0 %v1819
        %v1821 = vpop.xlane.xlu0 %1820
        %v1822 = vsel %vm1635, %v1634, 0.0
        %1823 = vadd.xlane.f32.xlu0 %v1822
        %v1824 = vpop.xlane.xlu0 %1823
        %v1825 = vld [vmem:[#allocation2] sm:$0x1]
        %v1827 = vlaneseq
        %v1828 = vshrl.u32 %v1827, 7
        %v1829 = vsub.s32 0, %v1828
        %v1830 = vrot.slane %v1825, %v1829
        %v1832 = vadd.f32 %v1638, %v1830
        %v1833 = vadd.f32 %v1641, %v1830
        %v1834 = vadd.f32 %v1644, %v1830
        %v1835 = vadd.f32 %v1647, %v1830
        %v1836 = vadd.f32 %v1650, %v1830
        %v1837 = vadd.f32 %v1653, %v1830
        %v1838 = vadd.f32 %v1656, %v1830
        %v1839 = vadd.f32 %v1659, %v1830
        %v1840 = vadd.f32 %v1662, %v1830
        %v1841 = vadd.f32 %v1665, %v1830
        %v1842 = vadd.f32 %v1668, %v1830
        %v1843 = vadd.f32 %v1671, %v1830
        %v1844 = vadd.f32 %v1674, %v1830
        %v1845 = vadd.f32 %v1677, %v1830
        %v1846 = vadd.f32 %v1680, %v1830
        %v1847 = vadd.f32 %v1683, %v1830
        %v1848 = vadd.f32 %v1686, %v1830
        %v1849 = vadd.f32 %v1689, %v1830
        %v1850 = vadd.f32 %v1692, %v1830
        %v1851 = vadd.f32 %v1695, %v1830
        %v1852 = vadd.f32 %v1698, %v1830
        %v1853 = vadd.f32 %v1701, %v1830
        %v1854 = vadd.f32 %v1704, %v1830
        %v1855 = vadd.f32 %v1707, %v1830
        %v1856 = vadd.f32 %v1710, %v1830
        %v1857 = vadd.f32 %v1713, %v1830
        %v1858 = vadd.f32 %v1716, %v1830
        %v1859 = vadd.f32 %v1719, %v1830
        %v1860 = vadd.f32 %v1722, %v1830
        %v1861 = vadd.f32 %v1725, %v1830
        %v1862 = vadd.f32 %v1728, %v1830
        %v1863 = vadd.f32 %v1731, %v1830
        %v1864 = vadd.f32 %v1734, %v1830
        %v1865 = vadd.f32 %v1737, %v1830
        %v1866 = vadd.f32 %v1740, %v1830
        %v1867 = vadd.f32 %v1743, %v1830
        %v1868 = vadd.f32 %v1746, %v1830
        %v1869 = vadd.f32 %v1749, %v1830
        %v1870 = vadd.f32 %v1752, %v1830
        %v1871 = vadd.f32 %v1755, %v1830
        %v1872 = vadd.f32 %v1758, %v1830
        %v1873 = vadd.f32 %v1761, %v1830
        %v1874 = vadd.f32 %v1764, %v1830
        %v1875 = vadd.f32 %v1767, %v1830
        %v1876 = vadd.f32 %v1770, %v1830
        %v1877 = vadd.f32 %v1773, %v1830
        %v1878 = vadd.f32 %v1776, %v1830
        %v1879 = vadd.f32 %v1779, %v1830
        %v1880 = vadd.f32 %v1782, %v1830
        %v1881 = vadd.f32 %v1785, %v1830
        %v1882 = vadd.f32 %v1788, %v1830
        %v1883 = vadd.f32 %v1791, %v1830
        %v1884 = vadd.f32 %v1794, %v1830
        %v1885 = vadd.f32 %v1797, %v1830
        %v1886 = vadd.f32 %v1800, %v1830
        %v1887 = vadd.f32 %v1803, %v1830
        %v1888 = vadd.f32 %v1806, %v1830
        %v1889 = vadd.f32 %v1809, %v1830
        %v1890 = vadd.f32 %v1812, %v1830
        %v1891 = vadd.f32 %v1815, %v1830
        %v1892 = vadd.f32 %v1818, %v1830
        %v1893 = vadd.f32 %v1821, %v1830
        %v1894 = vadd.f32 %v1824, %v1830
        %vm1895 = vcmask 7168
        %1896 = vst.msk [vmem:[%s287] sm:$0xff] %vm1895, %v1832
        %1897 = vst.msk [vmem:[%s287 + $0x8] sm:$0xff] %vm1895, %v1833
        %1898 = vst.msk [vmem:[%s287 + $0x10] sm:$0xff] %vm1895, %v1834
        %1899 = vst.msk [vmem:[%s287 + $0x18] sm:$0xff] %vm1895, %v1835
        %1900 = vst.msk [vmem:[%s287 + $0x20] sm:$0xff] %vm1895, %v1836
        %1901 = vst.msk [vmem:[%s287 + $0x28] sm:$0xff] %vm1895, %v1837
        %1902 = vst.msk [vmem:[%s287 + $0x30] sm:$0xff] %vm1895, %v1838
        %1903 = vst.msk [vmem:[%s287 + $0x38] sm:$0xff] %vm1895, %v1839
        %1904 = vst.msk [vmem:[%s287 + $0x40] sm:$0xff] %vm1895, %v1840
        %1905 = vst.msk [vmem:[%s287 + $0x48] sm:$0xff] %vm1895, %v1841
        %1906 = vst.msk [vmem:[%s287 + $0x50] sm:$0xff] %vm1895, %v1842
        %1907 = vst.msk [vmem:[%s287 + $0x58] sm:$0xff] %vm1895, %v1843
        %1908 = vst.msk [vmem:[%s287 + $0x60] sm:$0xff] %vm1895, %v1844
        %1909 = vst.msk [vmem:[%s287 + $0x68] sm:$0xff] %vm1895, %v1845
        %1910 = vst.msk [vmem:[%s287 + $0x70] sm:$0xff] %vm1895, %v1846
        %1911 = vst.msk [vmem:[%s287 + $0x78] sm:$0xff] %vm1895, %v1847
        %1912 = vst.msk [vmem:[%s287 + $0x80] sm:$0xff] %vm1895, %v1848
        %1913 = vst.msk [vmem:[%s287 + $0x88] sm:$0xff] %vm1895, %v1849
        %1914 = vst.msk [vmem:[%s287 + $0x90] sm:$0xff] %vm1895, %v1850
        %1915 = vst.msk [vmem:[%s287 + $0x98] sm:$0xff] %vm1895, %v1851
        %1916 = vst.msk [vmem:[%s287 + $0xa0] sm:$0xff] %vm1895, %v1852
        %1917 = vst.msk [vmem:[%s287 + $0xa8] sm:$0xff] %vm1895, %v1853
        %1918 = vst.msk [vmem:[%s287 + $0xb0] sm:$0xff] %vm1895, %v1854
        %1919 = vst.msk [vmem:[%s287 + $0xb8] sm:$0xff] %vm1895, %v1855
        %1920 = vst.msk [vmem:[%s287 + $0xc0] sm:$0xff] %vm1895, %v1856
        %1921 = vst.msk [vmem:[%s287 + $0xc8] sm:$0xff] %vm1895, %v1857
        %1922 = vst.msk [vmem:[%s287 + $0xd0] sm:$0xff] %vm1895, %v1858
        %1923 = vst.msk [vmem:[%s287 + $0xd8] sm:$0xff] %vm1895, %v1859
        %1924 = vst.msk [vmem:[%s287 + $0xe0] sm:$0xff] %vm1895, %v1860
        %1925 = vst.msk [vmem:[%s287 + $0xe8] sm:$0xff] %vm1895, %v1861
        %1926 = vst.msk [vmem:[%s287 + $0xf0] sm:$0xff] %vm1895, %v1862
        %1927 = vst.msk [vmem:[%s287 + $0xf8] sm:$0xff] %vm1895, %v1863
        %1928 = vst.msk [vmem:[%s287 + $0x100] sm:$0xff] %vm1895, %v1864
        %1929 = vst.msk [vmem:[%s287 + $0x108] sm:$0xff] %vm1895, %v1865
        %1930 = vst.msk [vmem:[%s287 + $0x110] sm:$0xff] %vm1895, %v1866
        %1931 = vst.msk [vmem:[%s287 + $0x118] sm:$0xff] %vm1895, %v1867
        %1932 = vst.msk [vmem:[%s287 + $0x120] sm:$0xff] %vm1895, %v1868
        %1933 = vst.msk [vmem:[%s287 + $0x128] sm:$0xff] %vm1895, %v1869
        %1934 = vst.msk [vmem:[%s287 + $0x130] sm:$0xff] %vm1895, %v1870
        %1935 = vst.msk [vmem:[%s287 + $0x138] sm:$0xff] %vm1895, %v1871
        %1936 = vst.msk [vmem:[%s287 + $0x140] sm:$0xff] %vm1895, %v1872
        %1937 = vst.msk [vmem:[%s287 + $0x148] sm:$0xff] %vm1895, %v1873
        %1938 = vst.msk [vmem:[%s287 + $0x150] sm:$0xff] %vm1895, %v1874
        %1939 = vst.msk [vmem:[%s287 + $0x158] sm:$0xff] %vm1895, %v1875
        %1940 = vst.msk [vmem:[%s287 + $0x160] sm:$0xff] %vm1895, %v1876
        %1941 = vst.msk [vmem:[%s287 + $0x168] sm:$0xff] %vm1895, %v1877
        %1942 = vst.msk [vmem:[%s287 + $0x170] sm:$0xff] %vm1895, %v1878
        %1943 = vst.msk [vmem:[%s287 + $0x178] sm:$0xff] %vm1895, %v1879
        %1944 = vst.msk [vmem:[%s287 + $0x180] sm:$0xff] %vm1895, %v1880
        %1945 = vst.msk [vmem:[%s287 + $0x188] sm:$0xff] %vm1895, %v1881
        %1946 = vst.msk [vmem:[%s287 + $0x190] sm:$0xff] %vm1895, %v1882
        %1947 = vst.msk [vmem:[%s287 + $0x198] sm:$0xff] %vm1895, %v1883
        %1948 = vst.msk [vmem:[%s287 + $0x1a0] sm:$0xff] %vm1895, %v1884
        %1949 = vst.msk [vmem:[%s287 + $0x1a8] sm:$0xff] %vm1895, %v1885
        %1950 = vst.msk [vmem:[%s287 + $0x1b0] sm:$0xff] %vm1895, %v1886
        %1951 = vst.msk [vmem:[%s287 + $0x1b8] sm:$0xff] %vm1895, %v1887
        %1952 = vst.msk [vmem:[%s287 + $0x1c0] sm:$0xff] %vm1895, %v1888
        %1953 = vst.msk [vmem:[%s287 + $0x1c8] sm:$0xff] %vm1895, %v1889
        %1954 = vst.msk [vmem:[%s287 + $0x1d0] sm:$0xff] %vm1895, %v1890
        %1955 = vst.msk [vmem:[%s287 + $0x1d8] sm:$0xff] %vm1895, %v1891
        %1956 = vst.msk [vmem:[%s287 + $0x1e0] sm:$0xff] %vm1895, %v1892
        %1957 = vst.msk [vmem:[%s287 + $0x1e8] sm:$0xff] %vm1895, %v1893
        %1958 = vst.msk [vmem:[%s287 + $0x1f0] sm:$0xff] %vm1895, %v1894
        %s1959 = sand.u32 %s180, 1
        %s1960 = sand.u32 %s180, 1
        %s1961 = smul.addr %s1960, 504
        %s1962 = scalar_lea.vmem [#allocation3], %s1961
        // Predicated region
        $region49: #{tpu_custom_call.1} parent=47 // pred_check
          %p1963 = pneg %p190
        $region50: #{tpu_custom_call.1} parent=47 // pred_check_branch
          %1965 = sbr.rel (%p1963) target = $region52
        $region51: #{tpu_custom_call.1} parent=47 // pred_region
          %s1966 = smul.u32 63, %s20
          %s1967 = ssub.s32 125, %s1966
          %p1968 = scmp.lt.s32.totalorder %s1967, 63
          %s1969 = scalar_select %p1968, %s1967, 63
          %s1970 = smul.u32 128, %s1969
          %p1971 = scmp.ne.s32.totalorder 0, %s1970
          %s1972 = smul.addr %s1966, 8
          %s1973 = scalar_lea.vmem %s7, %s1972
          // Predicated region
          $region53: #{tpu_custom_call.1} parent=51 // pred_check
            %p1974 = pneg %p1971
          $region54: #{tpu_custom_call.1} parent=51 // pred_check_branch
            %1976 = sbr.rel (%p1974) target = $region56
          $region55: #{tpu_custom_call.1} parent=51 // pred_region
            // Predicated region
            $region57: #{tpu_custom_call.1} parent=55 // pred_check
              _
            $region58: #{tpu_custom_call.1} parent=55 // pred_check_branch
              %1978 = sbr.rel (0) target = $region60
            $region59: #{tpu_custom_call.1} parent=55 // pred_region
              // Predicated region
              $region79: #{tpu_custom_call.1} parent=59 // pred_check
                _
              $region80: #{tpu_custom_call.1} parent=59 // pred_check_branch
                %2153 = sbr.rel (0) target = $region82
              $region81: #{tpu_custom_call.1} parent=59 // pred_region
                %s2154 = sdiv.u32.pop %s1969, 63
                %s2155 = srem.u32.pop %s1969, 63
                // While loop
                $region83: #{tpu_custom_call.1} parent=81 // loop_pre_header
                  _
                $region84: #{tpu_custom_call.1} parent=81 // loop_header
                  %s2157 = sphi 0, %s2159
                  %p2158 = scmp.ge.s32.totalorder %s2157, %s2154
                  %s2162 = sphi 0, %s2293
                  %s2163 = sphi %s1962, %s2296
                  %s2164 = sphi %s1973, %s2297
                $region85: #{tpu_custom_call.1} parent=81 // loop_header_branch
                  %2161 = sbr.rel (%p2158) target = $region89
                $region86: #{tpu_custom_call.1} parent=81 // loop_body
                  %v2165 = vld [vmem:[%s2163] sm:$0xff]
                  %2166 = vst [vmem:[%s2164] sm:$0xff] %v2165
                  %v2167 = vld [vmem:[%s2163 + $0x8] sm:$0xff]
                  %2168 = vst [vmem:[%s2164 + $0x8] sm:$0xff] %v2167
                  %v2169 = vld [vmem:[%s2163 + $0x10] sm:$0xff]
                  %2170 = vst [vmem:[%s2164 + $0x10] sm:$0xff] %v2169
                  %v2171 = vld [vmem:[%s2163 + $0x18] sm:$0xff]
                  %2172 = vst [vmem:[%s2164 + $0x18] sm:$0xff] %v2171
                  %v2173 = vld [vmem:[%s2163 + $0x20] sm:$0xff]
                  %2174 = vst [vmem:[%s2164 + $0x20] sm:$0xff] %v2173
                  %v2175 = vld [vmem:[%s2163 + $0x28] sm:$0xff]
                  %2176 = vst [vmem:[%s2164 + $0x28] sm:$0xff] %v2175
                  %v2177 = vld [vmem:[%s2163 + $0x30] sm:$0xff]
                  %2178 = vst [vmem:[%s2164 + $0x30] sm:$0xff] %v2177
                  %v2179 = vld [vmem:[%s2163 + $0x38] sm:$0xff]
                  %2180 = vst [vmem:[%s2164 + $0x38] sm:$0xff] %v2179
                  %v2181 = vld [vmem:[%s2163 + $0x40] sm:$0xff]
                  %2182 = vst [vmem:[%s2164 + $0x40] sm:$0xff] %v2181
                  %v2183 = vld [vmem:[%s2163 + $0x48] sm:$0xff]
                  %2184 = vst [vmem:[%s2164 + $0x48] sm:$0xff] %v2183
                  %v2185 = vld [vmem:[%s2163 + $0x50] sm:$0xff]
                  %2186 = vst [vmem:[%s2164 + $0x50] sm:$0xff] %v2185
                  %v2187 = vld [vmem:[%s2163 + $0x58] sm:$0xff]
                  %2188 = vst [vmem:[%s2164 + $0x58] sm:$0xff] %v2187
                  %v2189 = vld [vmem:[%s2163 + $0x60] sm:$0xff]
                  %2190 = vst [vmem:[%s2164 + $0x60] sm:$0xff] %v2189
                  %v2191 = vld [vmem:[%s2163 + $0x68] sm:$0xff]
                  %2192 = vst [vmem:[%s2164 + $0x68] sm:$0xff] %v2191
                  %v2193 = vld [vmem:[%s2163 + $0x70] sm:$0xff]
                  %2194 = vst [vmem:[%s2164 + $0x70] sm:$0xff] %v2193
                  %v2195 = vld [vmem:[%s2163 + $0x78] sm:$0xff]
                  %2196 = vst [vmem:[%s2164 + $0x78] sm:$0xff] %v2195
                  %v2197 = vld [vmem:[%s2163 + $0x80] sm:$0xff]
                  %2198 = vst [vmem:[%s2164 + $0x80] sm:$0xff] %v2197
                  %v2199 = vld [vmem:[%s2163 + $0x88] sm:$0xff]
                  %2200 = vst [vmem:[%s2164 + $0x88] sm:$0xff] %v2199
                  %v2201 = vld [vmem:[%s2163 + $0x90] sm:$0xff]
                  %2202 = vst [vmem:[%s2164 + $0x90] sm:$0xff] %v2201
                  %v2203 = vld [vmem:[%s2163 + $0x98] sm:$0xff]
                  %2204 = vst [vmem:[%s2164 + $0x98] sm:$0xff] %v2203
                  %v2205 = vld [vmem:[%s2163 + $0xa0] sm:$0xff]
                  %2206 = vst [vmem:[%s2164 + $0xa0] sm:$0xff] %v2205
                  %v2207 = vld [vmem:[%s2163 + $0xa8] sm:$0xff]
                  %2208 = vst [vmem:[%s2164 + $0xa8] sm:$0xff] %v2207
                  %v2209 = vld [vmem:[%s2163 + $0xb0] sm:$0xff]
                  %2210 = vst [vmem:[%s2164 + $0xb0] sm:$0xff] %v2209
                  %v2211 = vld [vmem:[%s2163 + $0xb8] sm:$0xff]
                  %2212 = vst [vmem:[%s2164 + $0xb8] sm:$0xff] %v2211
                  %v2213 = vld [vmem:[%s2163 + $0xc0] sm:$0xff]
                  %2214 = vst [vmem:[%s2164 + $0xc0] sm:$0xff] %v2213
                  %v2215 = vld [vmem:[%s2163 + $0xc8] sm:$0xff]
                  %2216 = vst [vmem:[%s2164 + $0xc8] sm:$0xff] %v2215
                  %v2217 = vld [vmem:[%s2163 + $0xd0] sm:$0xff]
                  %2218 = vst [vmem:[%s2164 + $0xd0] sm:$0xff] %v2217
                  %v2219 = vld [vmem:[%s2163 + $0xd8] sm:$0xff]
                  %2220 = vst [vmem:[%s2164 + $0xd8] sm:$0xff] %v2219
                  %v2221 = vld [vmem:[%s2163 + $0xe0] sm:$0xff]
                  %2222 = vst [vmem:[%s2164 + $0xe0] sm:$0xff] %v2221
                  %v2223 = vld [vmem:[%s2163 + $0xe8] sm:$0xff]
                  %2224 = vst [vmem:[%s2164 + $0xe8] sm:$0xff] %v2223
                  %v2225 = vld [vmem:[%s2163 + $0xf0] sm:$0xff]
                  %2226 = vst [vmem:[%s2164 + $0xf0] sm:$0xff] %v2225
                  %v2227 = vld [vmem:[%s2163 + $0xf8] sm:$0xff]
                  %2228 = vst [vmem:[%s2164 + $0xf8] sm:$0xff] %v2227
                  %v2229 = vld [vmem:[%s2163 + $0x100] sm:$0xff]
                  %2230 = vst [vmem:[%s2164 + $0x100] sm:$0xff] %v2229
                  %v2231 = vld [vmem:[%s2163 + $0x108] sm:$0xff]
                  %2232 = vst [vmem:[%s2164 + $0x108] sm:$0xff] %v2231
                  %v2233 = vld [vmem:[%s2163 + $0x110] sm:$0xff]
                  %2234 = vst [vmem:[%s2164 + $0x110] sm:$0xff] %v2233
                  %v2235 = vld [vmem:[%s2163 + $0x118] sm:$0xff]
                  %2236 = vst [vmem:[%s2164 + $0x118] sm:$0xff] %v2235
                  %v2237 = vld [vmem:[%s2163 + $0x120] sm:$0xff]
                  %2238 = vst [vmem:[%s2164 + $0x120] sm:$0xff] %v2237
                  %v2239 = vld [vmem:[%s2163 + $0x128] sm:$0xff]
                  %2240 = vst [vmem:[%s2164 + $0x128] sm:$0xff] %v2239
                  %v2241 = vld [vmem:[%s2163 + $0x130] sm:$0xff]
                  %2242 = vst [vmem:[%s2164 + $0x130] sm:$0xff] %v2241
                  %v2243 = vld [vmem:[%s2163 + $0x138] sm:$0xff]
                  %2244 = vst [vmem:[%s2164 + $0x138] sm:$0xff] %v2243
                  %v2245 = vld [vmem:[%s2163 + $0x140] sm:$0xff]
                  %2246 = vst [vmem:[%s2164 + $0x140] sm:$0xff] %v2245
                  %v2247 = vld [vmem:[%s2163 + $0x148] sm:$0xff]
                  %2248 = vst [vmem:[%s2164 + $0x148] sm:$0xff] %v2247
                  %v2249 = vld [vmem:[%s2163 + $0x150] sm:$0xff]
                  %2250 = vst [vmem:[%s2164 + $0x150] sm:$0xff] %v2249
                  %v2251 = vld [vmem:[%s2163 + $0x158] sm:$0xff]
                  %2252 = vst [vmem:[%s2164 + $0x158] sm:$0xff] %v2251
                  %v2253 = vld [vmem:[%s2163 + $0x160] sm:$0xff]
                  %2254 = vst [vmem:[%s2164 + $0x160] sm:$0xff] %v2253
                  %v2255 = vld [vmem:[%s2163 + $0x168] sm:$0xff]
                  %2256 = vst [vmem:[%s2164 + $0x168] sm:$0xff] %v2255
                  %v2257 = vld [vmem:[%s2163 + $0x170] sm:$0xff]
                  %2258 = vst [vmem:[%s2164 + $0x170] sm:$0xff] %v2257
                  %v2259 = vld [vmem:[%s2163 + $0x178] sm:$0xff]
                  %2260 = vst [vmem:[%s2164 + $0x178] sm:$0xff] %v2259
                  %v2261 = vld [vmem:[%s2163 + $0x180] sm:$0xff]
                  %2262 = vst [vmem:[%s2164 + $0x180] sm:$0xff] %v2261
                  %v2263 = vld [vmem:[%s2163 + $0x188] sm:$0xff]
                  %2264 = vst [vmem:[%s2164 + $0x188] sm:$0xff] %v2263
                  %v2265 = vld [vmem:[%s2163 + $0x190] sm:$0xff]
                  %2266 = vst [vmem:[%s2164 + $0x190] sm:$0xff] %v2265
                  %v2267 = vld [vmem:[%s2163 + $0x198] sm:$0xff]
                  %2268 = vst [vmem:[%s2164 + $0x198] sm:$0xff] %v2267
                  %v2269 = vld [vmem:[%s2163 + $0x1a0] sm:$0xff]
                  %2270 = vst [vmem:[%s2164 + $0x1a0] sm:$0xff] %v2269
                  %v2271 = vld [vmem:[%s2163 + $0x1a8] sm:$0xff]
                  %2272 = vst [vmem:[%s2164 + $0x1a8] sm:$0xff] %v2271
                  %v2273 = vld [vmem:[%s2163 + $0x1b0] sm:$0xff]
                  %2274 = vst [vmem:[%s2164 + $0x1b0] sm:$0xff] %v2273
                  %v2275 = vld [vmem:[%s2163 + $0x1b8] sm:$0xff]
                  %2276 = vst [vmem:[%s2164 + $0x1b8] sm:$0xff] %v2275
                  %v2277 = vld [vmem:[%s2163 + $0x1c0] sm:$0xff]
                  %2278 = vst [vmem:[%s2164 + $0x1c0] sm:$0xff] %v2277
                  %v2279 = vld [vmem:[%s2163 + $0x1c8] sm:$0xff]
                  %2280 = vst [vmem:[%s2164 + $0x1c8] sm:$0xff] %v2279
                  %v2281 = vld [vmem:[%s2163 + $0x1d0] sm:$0xff]
                  %2282 = vst [vmem:[%s2164 + $0x1d0] sm:$0xff] %v2281
                  %v2283 = vld [vmem:[%s2163 + $0x1d8] sm:$0xff]
                  %2284 = vst [vmem:[%s2164 + $0x1d8] sm:$0xff] %v2283
                  %v2285 = vld [vmem:[%s2163 + $0x1e0] sm:$0xff]
                  %2286 = vst [vmem:[%s2164 + $0x1e0] sm:$0xff] %v2285
                  %v2287 = vld [vmem:[%s2163 + $0x1e8] sm:$0xff]
                  %2288 = vst [vmem:[%s2164 + $0x1e8] sm:$0xff] %v2287
                  %v2289 = vld [vmem:[%s2163 + $0x1f0] sm:$0xff]
                  %2290 = vst [vmem:[%s2164 + $0x1f0] sm:$0xff] %v2289
                  %s2291 = sadd.s32 1, %s2162
                  %p2292 = scmp.ge.s32.totalorder %s2291, %s2154
                  %s2293 = scalar_select %p2292, 0, %s2291
                  %s2294 = smul.u32 %s2293, 504
                  %s2295 = smul.u32 %s2293, 504
                  %s2296 = scalar_lea.vmem %s1962, %s2294 [#allocation3]
                  %s2297 = scalar_lea.vmem %s1973, %s2295
                $region87: #{tpu_custom_call.1} parent=81 // loop_footer
                  %s2159 = sadd.s32 %s2157, 1
                $region88: #{tpu_custom_call.1} parent=81 // loop_footer_branch
                  %2156 = sbr.rel target = $region84
                $region89: #{tpu_custom_call.1} parent=81 // loop_exit
                  _
                %s2298 = sdiv.u32.pop %s1969, 63
                %s2299 = srem.u32.pop %s1969, 63
                %s2300 = smul.u32 %s2298, 63
                %s2301 = smul.u32 8, %s2300
                %s2302 = scalar_lea.vmem %s1962, %s2301 [#allocation3]
                %s2303 = smul.u32 8, %s2300
                %s2304 = scalar_lea.vmem %s1973, %s2303
                // While loop
                $region90: #{tpu_custom_call.1} parent=81 // loop_pre_header
                  _
                $region91: #{tpu_custom_call.1} parent=81 // loop_header
                  %s2306 = sphi 0, %s2308
                  %p2307 = scmp.ge.s32.totalorder %s2306, %s2299
                  %s2311 = sphi 0, %s2318
                  %s2312 = sphi %s2302, %s2321
                  %s2313 = sphi %s2304, %s2322
                $region92: #{tpu_custom_call.1} parent=81 // loop_header_branch
                  %2310 = sbr.rel (%p2307) target = $region96
                $region93: #{tpu_custom_call.1} parent=81 // loop_body
                  %v2314 = vld [vmem:[%s2312] sm:$0xff]
                  %2315 = vst [vmem:[%s2313] sm:$0xff] %v2314
                  %s2316 = sadd.s32 1, %s2311
                  %p2317 = scmp.ge.s32.totalorder %s2316, %s2299
                  %s2318 = scalar_select %p2317, 0, %s2316
                  %s2319 = smul.u32 %s2318, 8
                  %s2320 = smul.u32 %s2318, 8
                  %s2321 = scalar_lea.vmem %s2302, %s2319 [#allocation3]
                  %s2322 = scalar_lea.vmem %s2304, %s2320
                $region94: #{tpu_custom_call.1} parent=81 // loop_footer
                  %s2308 = sadd.s32 %s2306, 1
                $region95: #{tpu_custom_call.1} parent=81 // loop_footer_branch
                  %2305 = sbr.rel target = $region91
                $region96: #{tpu_custom_call.1} parent=81 // loop_exit
                  _
              $region82: #{tpu_custom_call.1} parent=59 // pred_fallthru
                _
              // Predicated region
              $region97: #{tpu_custom_call.1} parent=59 // pred_check
                _
              $region98: #{tpu_custom_call.1} parent=59 // pred_check_branch
                %2324 = sbr.rel target = $region100
              $region99: #{tpu_custom_call.1} parent=59 // pred_region
                _
              $region100: #{tpu_custom_call.1} parent=59 // pred_fallthru
                _
            $region60: #{tpu_custom_call.1} parent=55 // pred_fallthru
              _
            // Predicated region
            $region61: #{tpu_custom_call.1} parent=55 // pred_check
              _
            $region62: #{tpu_custom_call.1} parent=55 // pred_check_branch
              %1980 = sbr.rel target = $region64
            $region63: #{tpu_custom_call.1} parent=55 // pred_region
              %s1982 = ssub.s32 256, 1
              %s1983 = sdiv.u32.pop %s1969, 63
              %s1984 = srem.u32.pop %s1969, 63
              // While loop
              $region65: #{tpu_custom_call.1} parent=63 // loop_pre_header
                _
              $region66: #{tpu_custom_call.1} parent=63 // loop_header
                %s1986 = sphi 0, %s1988
                %p1987 = scmp.ge.s32.totalorder %s1986, %s1983
                %s1991 = sphi 0, %s2122
                %s1992 = sphi %s1962, %s2125
                %s1993 = sphi %s1973, %s2126
              $region67: #{tpu_custom_call.1} parent=63 // loop_header_branch
                %1990 = sbr.rel (%p1987) target = $region71
              $region68: #{tpu_custom_call.1} parent=63 // loop_body
                %v1994 = vld [vmem:[%s1992] sm:%s1982]
                %1995 = vst [vmem:[%s1993] sm:%s1982] %v1994
                %v1996 = vld [vmem:[%s1992 + $0x8] sm:%s1982]
                %1997 = vst [vmem:[%s1993 + $0x8] sm:%s1982] %v1996
                %v1998 = vld [vmem:[%s1992 + $0x10] sm:%s1982]
                %1999 = vst [vmem:[%s1993 + $0x10] sm:%s1982] %v1998
                %v2000 = vld [vmem:[%s1992 + $0x18] sm:%s1982]
                %2001 = vst [vmem:[%s1993 + $0x18] sm:%s1982] %v2000
                %v2002 = vld [vmem:[%s1992 + $0x20] sm:%s1982]
                %2003 = vst [vmem:[%s1993 + $0x20] sm:%s1982] %v2002
                %v2004 = vld [vmem:[%s1992 + $0x28] sm:%s1982]
                %2005 = vst [vmem:[%s1993 + $0x28] sm:%s1982] %v2004
                %v2006 = vld [vmem:[%s1992 + $0x30] sm:%s1982]
                %2007 = vst [vmem:[%s1993 + $0x30] sm:%s1982] %v2006
                %v2008 = vld [vmem:[%s1992 + $0x38] sm:%s1982]
                %2009 = vst [vmem:[%s1993 + $0x38] sm:%s1982] %v2008
                %v2010 = vld [vmem:[%s1992 + $0x40] sm:%s1982]
                %2011 = vst [vmem:[%s1993 + $0x40] sm:%s1982] %v2010
                %v2012 = vld [vmem:[%s1992 + $0x48] sm:%s1982]
                %2013 = vst [vmem:[%s1993 + $0x48] sm:%s1982] %v2012
                %v2014 = vld [vmem:[%s1992 + $0x50] sm:%s1982]
                %2015 = vst [vmem:[%s1993 + $0x50] sm:%s1982] %v2014
                %v2016 = vld [vmem:[%s1992 + $0x58] sm:%s1982]
                %2017 = vst [vmem:[%s1993 + $0x58] sm:%s1982] %v2016
                %v2018 = vld [vmem:[%s1992 + $0x60] sm:%s1982]
                %2019 = vst [vmem:[%s1993 + $0x60] sm:%s1982] %v2018
                %v2020 = vld [vmem:[%s1992 + $0x68] sm:%s1982]
                %2021 = vst [vmem:[%s1993 + $0x68] sm:%s1982] %v2020
                %v2022 = vld [vmem:[%s1992 + $0x70] sm:%s1982]
                %2023 = vst [vmem:[%s1993 + $0x70] sm:%s1982] %v2022
                %v2024 = vld [vmem:[%s1992 + $0x78] sm:%s1982]
                %2025 = vst [vmem:[%s1993 + $0x78] sm:%s1982] %v2024
                %v2026 = vld [vmem:[%s1992 + $0x80] sm:%s1982]
                %2027 = vst [vmem:[%s1993 + $0x80] sm:%s1982] %v2026
                %v2028 = vld [vmem:[%s1992 + $0x88] sm:%s1982]
                %2029 = vst [vmem:[%s1993 + $0x88] sm:%s1982] %v2028
                %v2030 = vld [vmem:[%s1992 + $0x90] sm:%s1982]
                %2031 = vst [vmem:[%s1993 + $0x90] sm:%s1982] %v2030
                %v2032 = vld [vmem:[%s1992 + $0x98] sm:%s1982]
                %2033 = vst [vmem:[%s1993 + $0x98] sm:%s1982] %v2032
                %v2034 = vld [vmem:[%s1992 + $0xa0] sm:%s1982]
                %2035 = vst [vmem:[%s1993 + $0xa0] sm:%s1982] %v2034
                %v2036 = vld [vmem:[%s1992 + $0xa8] sm:%s1982]
                %2037 = vst [vmem:[%s1993 + $0xa8] sm:%s1982] %v2036
                %v2038 = vld [vmem:[%s1992 + $0xb0] sm:%s1982]
                %2039 = vst [vmem:[%s1993 + $0xb0] sm:%s1982] %v2038
                %v2040 = vld [vmem:[%s1992 + $0xb8] sm:%s1982]
                %2041 = vst [vmem:[%s1993 + $0xb8] sm:%s1982] %v2040
                %v2042 = vld [vmem:[%s1992 + $0xc0] sm:%s1982]
                %2043 = vst [vmem:[%s1993 + $0xc0] sm:%s1982] %v2042
                %v2044 = vld [vmem:[%s1992 + $0xc8] sm:%s1982]
                %2045 = vst [vmem:[%s1993 + $0xc8] sm:%s1982] %v2044
                %v2046 = vld [vmem:[%s1992 + $0xd0] sm:%s1982]
                %2047 = vst [vmem:[%s1993 + $0xd0] sm:%s1982] %v2046
                %v2048 = vld [vmem:[%s1992 + $0xd8] sm:%s1982]
                %2049 = vst [vmem:[%s1993 + $0xd8] sm:%s1982] %v2048
                %v2050 = vld [vmem:[%s1992 + $0xe0] sm:%s1982]
                %2051 = vst [vmem:[%s1993 + $0xe0] sm:%s1982] %v2050
                %v2052 = vld [vmem:[%s1992 + $0xe8] sm:%s1982]
                %2053 = vst [vmem:[%s1993 + $0xe8] sm:%s1982] %v2052
                %v2054 = vld [vmem:[%s1992 + $0xf0] sm:%s1982]
                %2055 = vst [vmem:[%s1993 + $0xf0] sm:%s1982] %v2054
                %v2056 = vld [vmem:[%s1992 + $0xf8] sm:%s1982]
                %2057 = vst [vmem:[%s1993 + $0xf8] sm:%s1982] %v2056
                %v2058 = vld [vmem:[%s1992 + $0x100] sm:%s1982]
                %2059 = vst [vmem:[%s1993 + $0x100] sm:%s1982] %v2058
                %v2060 = vld [vmem:[%s1992 + $0x108] sm:%s1982]
                %2061 = vst [vmem:[%s1993 + $0x108] sm:%s1982] %v2060
                %v2062 = vld [vmem:[%s1992 + $0x110] sm:%s1982]
                %2063 = vst [vmem:[%s1993 + $0x110] sm:%s1982] %v2062
                %v2064 = vld [vmem:[%s1992 + $0x118] sm:%s1982]
                %2065 = vst [vmem:[%s1993 + $0x118] sm:%s1982] %v2064
                %v2066 = vld [vmem:[%s1992 + $0x120] sm:%s1982]
                %2067 = vst [vmem:[%s1993 + $0x120] sm:%s1982] %v2066
                %v2068 = vld [vmem:[%s1992 + $0x128] sm:%s1982]
                %2069 = vst [vmem:[%s1993 + $0x128] sm:%s1982] %v2068
                %v2070 = vld [vmem:[%s1992 + $0x130] sm:%s1982]
                %2071 = vst [vmem:[%s1993 + $0x130] sm:%s1982] %v2070
                %v2072 = vld [vmem:[%s1992 + $0x138] sm:%s1982]
                %2073 = vst [vmem:[%s1993 + $0x138] sm:%s1982] %v2072
                %v2074 = vld [vmem:[%s1992 + $0x140] sm:%s1982]
                %2075 = vst [vmem:[%s1993 + $0x140] sm:%s1982] %v2074
                %v2076 = vld [vmem:[%s1992 + $0x148] sm:%s1982]
                %2077 = vst [vmem:[%s1993 + $0x148] sm:%s1982] %v2076
                %v2078 = vld [vmem:[%s1992 + $0x150] sm:%s1982]
                %2079 = vst [vmem:[%s1993 + $0x150] sm:%s1982] %v2078
                %v2080 = vld [vmem:[%s1992 + $0x158] sm:%s1982]
                %2081 = vst [vmem:[%s1993 + $0x158] sm:%s1982] %v2080
                %v2082 = vld [vmem:[%s1992 + $0x160] sm:%s1982]
                %2083 = vst [vmem:[%s1993 + $0x160] sm:%s1982] %v2082
                %v2084 = vld [vmem:[%s1992 + $0x168] sm:%s1982]
                %2085 = vst [vmem:[%s1993 + $0x168] sm:%s1982] %v2084
                %v2086 = vld [vmem:[%s1992 + $0x170] sm:%s1982]
                %2087 = vst [vmem:[%s1993 + $0x170] sm:%s1982] %v2086
                %v2088 = vld [vmem:[%s1992 + $0x178] sm:%s1982]
                %2089 = vst [vmem:[%s1993 + $0x178] sm:%s1982] %v2088
                %v2090 = vld [vmem:[%s1992 + $0x180] sm:%s1982]
                %2091 = vst [vmem:[%s1993 + $0x180] sm:%s1982] %v2090
                %v2092 = vld [vmem:[%s1992 + $0x188] sm:%s1982]
                %2093 = vst [vmem:[%s1993 + $0x188] sm:%s1982] %v2092
                %v2094 = vld [vmem:[%s1992 + $0x190] sm:%s1982]
                %2095 = vst [vmem:[%s1993 + $0x190] sm:%s1982] %v2094
                %v2096 = vld [vmem:[%s1992 + $0x198] sm:%s1982]
                %2097 = vst [vmem:[%s1993 + $0x198] sm:%s1982] %v2096
                %v2098 = vld [vmem:[%s1992 + $0x1a0] sm:%s1982]
                %2099 = vst [vmem:[%s1993 + $0x1a0] sm:%s1982] %v2098
                %v2100 = vld [vmem:[%s1992 + $0x1a8] sm:%s1982]
                %2101 = vst [vmem:[%s1993 + $0x1a8] sm:%s1982] %v2100
                %v2102 = vld [vmem:[%s1992 + $0x1b0] sm:%s1982]
                %2103 = vst [vmem:[%s1993 + $0x1b0] sm:%s1982] %v2102
                %v2104 = vld [vmem:[%s1992 + $0x1b8] sm:%s1982]
                %2105 = vst [vmem:[%s1993 + $0x1b8] sm:%s1982] %v2104
                %v2106 = vld [vmem:[%s1992 + $0x1c0] sm:%s1982]
                %2107 = vst [vmem:[%s1993 + $0x1c0] sm:%s1982] %v2106
                %v2108 = vld [vmem:[%s1992 + $0x1c8] sm:%s1982]
                %2109 = vst [vmem:[%s1993 + $0x1c8] sm:%s1982] %v2108
                %v2110 = vld [vmem:[%s1992 + $0x1d0] sm:%s1982]
                %2111 = vst [vmem:[%s1993 + $0x1d0] sm:%s1982] %v2110
                %v2112 = vld [vmem:[%s1992 + $0x1d8] sm:%s1982]
                %2113 = vst [vmem:[%s1993 + $0x1d8] sm:%s1982] %v2112
                %v2114 = vld [vmem:[%s1992 + $0x1e0] sm:%s1982]
                %2115 = vst [vmem:[%s1993 + $0x1e0] sm:%s1982] %v2114
                %v2116 = vld [vmem:[%s1992 + $0x1e8] sm:%s1982]
                %2117 = vst [vmem:[%s1993 + $0x1e8] sm:%s1982] %v2116
                %v2118 = vld [vmem:[%s1992 + $0x1f0] sm:%s1982]
                %2119 = vst [vmem:[%s1993 + $0x1f0] sm:%s1982] %v2118
                %s2120 = sadd.s32 1, %s1991
                %p2121 = scmp.ge.s32.totalorder %s2120, %s1983
                %s2122 = scalar_select %p2121, 0, %s2120
                %s2123 = smul.u32 %s2122, 504
                %s2124 = smul.u32 %s2122, 504
                %s2125 = scalar_lea.vmem %s1962, %s2123 [#allocation3]
                %s2126 = scalar_lea.vmem %s1973, %s2124
              $region69: #{tpu_custom_call.1} parent=63 // loop_footer
                %s1988 = sadd.s32 %s1986, 1
              $region70: #{tpu_custom_call.1} parent=63 // loop_footer_branch
                %1985 = sbr.rel target = $region66
              $region71: #{tpu_custom_call.1} parent=63 // loop_exit
                _
              %s2127 = sdiv.u32.pop %s1969, 63
              %s2128 = srem.u32.pop %s1969, 63
              %s2129 = smul.u32 %s2127, 63
              %s2130 = smul.u32 8, %s2129
              %s2131 = scalar_lea.vmem %s1962, %s2130 [#allocation3]
              %s2132 = smul.u32 8, %s2129
              %s2133 = scalar_lea.vmem %s1973, %s2132
              // While loop
              $region72: #{tpu_custom_call.1} parent=63 // loop_pre_header
                _
              $region73: #{tpu_custom_call.1} parent=63 // loop_header
                %s2135 = sphi 0, %s2137
                %p2136 = scmp.ge.s32.totalorder %s2135, %s2128
                %s2140 = sphi 0, %s2147
                %s2141 = sphi %s2131, %s2150
                %s2142 = sphi %s2133, %s2151
              $region74: #{tpu_custom_call.1} parent=63 // loop_header_branch
                %2139 = sbr.rel (%p2136) target = $region78
              $region75: #{tpu_custom_call.1} parent=63 // loop_body
                %v2143 = vld [vmem:[%s2141] sm:%s1982]
                %2144 = vst [vmem:[%s2142] sm:%s1982] %v2143
                %s2145 = sadd.s32 1, %s2140
                %p2146 = scmp.ge.s32.totalorder %s2145, %s2128
                %s2147 = scalar_select %p2146, 0, %s2145
                %s2148 = smul.u32 %s2147, 8
                %s2149 = smul.u32 %s2147, 8
                %s2150 = scalar_lea.vmem %s2131, %s2148 [#allocation3]
                %s2151 = scalar_lea.vmem %s2133, %s2149
              $region76: #{tpu_custom_call.1} parent=63 // loop_footer
                %s2137 = sadd.s32 %s2135, 1
              $region77: #{tpu_custom_call.1} parent=63 // loop_footer_branch
                %2134 = sbr.rel target = $region73
              $region78: #{tpu_custom_call.1} parent=63 // loop_exit
                _
            $region64: #{tpu_custom_call.1} parent=55 // pred_fallthru
              _
          $region56: #{tpu_custom_call.1} parent=51 // pred_fallthru
            _
          %2325 = vnop
        $region52: #{tpu_custom_call.1} parent=47 // pred_fallthru
          _
      $region48: #{tpu_custom_call.1} parent=5 // pred_fallthru
        _
      %p2326 = scmp.le.s32.totalorder 2, %s15
      // Predicated region
      $region101: #{tpu_custom_call.1} parent=5 // pred_check
        %p2327 = pneg %p2326
      $region102: #{tpu_custom_call.1} parent=5 // pred_check_branch
        %2329 = sbr.rel (%p2327) target = $region104
      $region103: #{tpu_custom_call.1} parent=5 // pred_region
        %s2330 = ssub.s32 %s15, 2
        // Predicated region
        $region105: #{tpu_custom_call.1} parent=103 // pred_check
          %p2331 = pneg %p196
        $region106: #{tpu_custom_call.1} parent=103 // pred_check_branch
          %2333 = sbr.rel (%p2331) target = $region108
        $region107: #{tpu_custom_call.1} parent=103 // pred_region
          %s2334 = sand.u32 %s181, 1
          %s2335 = sand.u32 %s181, 1
          %s2336 = smul.addr %s2335, 504
          %s2337 = scalar_lea.vmem [#allocation3], %s2336
        $region108: #{tpu_custom_call.1} parent=103 // pred_fallthru
          _
      $region104: #{tpu_custom_call.1} parent=5 // pred_fallthru
        _
    $region6: #{tpu_custom_call.1} parent=1 // loop_footer
      %s19 = sadd.s32 1, %s15
    $region7: #{tpu_custom_call.1} parent=1 // loop_footer_branch
      %14 = sbr.rel target = $region3
    $region8: #{tpu_custom_call.1} parent=1 // loop_exit
      _

</llo_original>
